<compile_context>
chip_gen: v6e
topology: v6e:2x2x1
jax: 0.10.0
libtpu: 0.0.40
codegen_flags: <defaults>
</compile_context>

<pallas_src>
import numpy as np
import jax
import jax.numpy as jnp
from jax import lax
from jax.experimental import pallas as pl
from jax.experimental.pallas import tpu as pltpu

NEG_SLOPE = 0.2
EPS = 1e-8


def _round_up(x, m):
    return ((x + m - 1) // m) * m


def _build_tap_masks(H, W):
    """(9, H*W) 0/1 masks: mask[t, p] = 1 iff pixel p shifted by tap t = (dy, dx)
    stays inside the image (== the zero padding of Conv2d(padding=1))."""
    HW = H * W
    idx = np.arange(HW)
    h, w = idx // W, idx % W
    masks = np.zeros((9, HW), np.float32)
    t = 0
    for dy in (-1, 0, 1):
        for dx in (-1, 0, 1):
            valid = (h + dy >= 0) & (h + dy < H) & (w + dx >= 0) & (w + dx < W)
            masks[t, valid] = 1.0
            t += 1
    return jnp.asarray(masks)


# ------------------------------ fused Pallas kernel ------------------------------ #

def _make_dense_block_kernel(cin0p, G, L, H, W):
    hw = H * W

    def kernel(x_ref, mask_ref, wres_ref, bres_ref, wl_ref, bl_ref,
               gam_ref, bet_ref, out_ref, slab_ref):
        # x_ref:    (1, cin0p, hw)        sample, channels (padded to 8) x flat spatial
        # mask_ref: (9, hw)               per-tap boundary masks (0/1)
        # wres_ref: (G, cin0p), bres_ref: (G, 1)
        # wl_ref:   (L, G, slab_rows)     packed conv weights, block/tap-major
        # bl/gam/bet: (L, G, 1)
        # out_ref:  (1, cin0p + L*G, hw)  padded new_feature_cat
        # slab_ref: (slab_rows, hw)       im2col slab, slab_rows = 9*(cin0p+(L-1)*G)

        def append_taps(block, row_base, nch):
            # Write the 9 shifted/zero-padded copies of `block` ((nch, hw)) into the
            # slab at rows [row_base + t*nch : row_base + (t+1)*nch).
            t = 0
            for dy in (-1, 0, 1):
                for dx in (-1, 0, 1):
                    if dy == 0 and dx == 0:
                        shifted = block
                    else:
                        # rolled[p] = block[(p + dy*W + dx) mod hw]; the mask zeroes
                        # the wrapped / out-of-image positions (== conv zero padding).
                        s = (-(dy * W + dx)) % hw
                        shifted = (pltpu.roll(block, shift=s, axis=1)
                                   * mask_ref[t:t + 1, :])
                    slab_ref[row_base + t * nch: row_base + (t + 1) * nch, :] = shifted
                    t += 1

        x0 = x_ref[0]                                    # (cin0p, hw)
        out_ref[0, 0:cin0p, :] = x0                      # leading channels of the cat

        # conv_res (1x1 conv): x_add = Wres @ x + b   (kept in vregs, not VMEM)
        x_add = (jnp.dot(wres_ref[...], x0, preferred_element_type=jnp.float32)
                 + bres_ref[...])                        # (G, hw)
        s_sum = jnp.zeros_like(x_add)                    # running sum of layer outs

        append_taps(x0, 0, cin0p)                        # block 0 of the slab

        for l in range(L):
            k_l = 9 * (cin0p + l * G)                    # rows written so far
            w_l = wl_ref[l][:, :k_l]
            # 3x3 conv of the concatenated features: single MXU matmul, growing K.
            y = (jnp.dot(w_l, slab_ref[0:k_l, :],
                         preferred_element_type=jnp.float32) + bl_ref[l])
            # LeakyReLU(negative_slope=0.2)
            y = jnp.where(y > 0, y, NEG_SLOPE * y)
            # InstanceNorm2d(eps=1e-8, affine): per-channel stats over H*W (two-pass).
            mean = jnp.mean(y, axis=1, keepdims=True)
            d = y - mean
            var = jnp.mean(d * d, axis=1, keepdims=True)
            y = d * (gam_ref[l] * lax.rsqrt(var + EPS)) + bet_ref[l]

            add = x_add + y                              # torch.add(x_add, out)
            out_ref[0, cin0p + l * G: cin0p + (l + 1) * G, :] = add

            if l < L - 1:
                # PyTorch: for i in range(len(features_add)-1): x_add += features_add[i+1]
                # == x_add += running_sum(out_0..out_l)
                s_sum = s_sum + y
                x_add = x_add + s_sum
                append_taps(add, 9 * cin0p + 9 * G * l, G)   # next layer's new taps

    return kernel


def dense_block_encoder_forward(x_nchw, params):
    """Forward of DenseBlock_Encoder; NCHW in / NCHW out, matching the PyTorch module."""
    N, cin0, H, W = x_nchw.shape
    G = params["res_b"].shape[0]
    L = len(params["layers"])
    hw = H * W
    cin0p = _round_up(cin0, 8)                        # 8-aligned original channels
    slab_rows = 9 * (cin0p + (L - 1) * G)             # im2col slab rows
    c_out_pad = cin0p + L * G                         # padded output channels
    c_total = cin0 + L * G
    f32 = jnp.float32

    # ---- pack parameters into the kernel layout (tiny, done outside the kernel) ----
    wres = params["res_w"].T.astype(f32)                               # (G, cin0)
    wres = jnp.pad(wres, ((0, 0), (0, cin0p - cin0)))                  # (G, cin0p)
    bres = params["res_b"].reshape(G, 1).astype(f32)

    wl, bl, gam, bet = [], [], [], []
    for l, lp in enumerate(params["layers"]):
        w = jnp.transpose(lp["w"].astype(f32), (3, 0, 1, 2))           # (G,3,3,cin_l)
        # block 0: original x channels, zero-padded to cin0p, tap-major within block
        w0 = jnp.pad(w[..., :cin0], ((0, 0), (0, 0), (0, 0), (0, cin0p - cin0)))
        parts = [w0.reshape(G, 9 * cin0p)]
        # blocks 1..l: the per-layer `add` features (G channels each), tap-major
        for j in range(l):
            wj = w[..., cin0 + j * G: cin0 + (j + 1) * G]
            parts.append(wj.reshape(G, 9 * G))
        wcat = jnp.concatenate(parts, axis=1)
        wcat = jnp.pad(wcat, ((0, 0), (0, slab_rows - wcat.shape[1])))
        wl.append(wcat)                                                # (G, slab_rows)
        bl.append(lp["b"].reshape(G, 1))
        gam.append(lp["gamma"].reshape(G, 1))
        bet.append(lp["beta"].reshape(G, 1))
    wl = jnp.stack(wl).astype(f32)                                     # (L,G,slab_rows)
    bl = jnp.stack(bl).astype(f32)
    gam = jnp.stack(gam).astype(f32)
    bet = jnp.stack(bet).astype(f32)

    tap_masks = _build_tap_masks(H, W)                                 # (9, hw)

    x_flat = x_nchw.astype(f32).reshape(N, cin0, hw)                   # free reshape
    x_pad = jnp.pad(x_flat, ((0, 0), (0, cin0p - cin0), (0, 0)))       # (N, cin0p, hw)

    kernel = _make_dense_block_kernel(cin0p, G, L, H, W)

    out_pad = pl.pallas_call(
        kernel,
        out_shape=jax.ShapeDtypeStruct((N, c_out_pad, hw), f32),
        grid=(N,),
        in_specs=[
            pl.BlockSpec((1, cin0p, hw), lambda n: (n, 0, 0)),
            pl.BlockSpec((9, hw), lambda n: (0, 0)),
            pl.BlockSpec((G, cin0p), lambda n: (0, 0)),
            pl.BlockSpec((G, 1), lambda n: (0, 0)),
            pl.BlockSpec((L, G, slab_rows), lambda n: (0, 0, 0)),
            pl.BlockSpec((L, G, 1), lambda n: (0, 0, 0)),
            pl.BlockSpec((L, G, 1), lambda n: (0, 0, 0)),
            pl.BlockSpec((L, G, 1), lambda n: (0, 0, 0)),
        ],
        out_specs=pl.BlockSpec((1, c_out_pad, hw), lambda n: (n, 0, 0)),
        scratch_shapes=[
            pltpu.VMEM((slab_rows, hw), f32),          # im2col slab (grows per layer)
        ],
        compiler_params=pltpu.CompilerParams(
            dimension_semantics=("parallel",)),
    )(x_pad, tap_masks, wres, bres, wl, bl, gam, bet)

    # Strip the channel padding inserted after the original x channels.
    if cin0p != cin0:
        out_flat = jnp.concatenate(
            [out_pad[:, :cin0, :], out_pad[:, cin0p:, :]], axis=1)
    else:
        out_flat = out_pad
    return out_flat.reshape(N, c_total, H, W)


# --------------------------- pure-JAX reference (check) --------------------------- #

def _ref_layer(x, x_add, w, b, gamma, beta):
    y = lax.conv_general_dilated(
        x, w, window_strides=(1, 1), padding=((1, 1), (1, 1)),
        dimension_numbers=("NHWC", "HWIO", "NHWC")) + b
    y = jnp.where(y > 0, y, NEG_SLOPE * y)
    mean = jnp.mean(y, axis=(1, 2), keepdims=True)
    var = jnp.mean((y - mean) ** 2, axis=(1, 2), keepdims=True)
    y = (y - mean) * lax.rsqrt(var + EPS) * gamma + beta
    return y, x_add + y


def dense_block_encoder_ref(x_nchw, params):
    x = jnp.transpose(x_nchw, (0, 2, 3, 1)).astype(jnp.float32)
    x_add = jnp.einsum("nhwc,co->nhwo", x, params["res_w"]) + params["res_b"]
    x_cat = x
    tail = []
    features_cat = [x]
    new_feature_cat = None
    for lp in params["layers"]:
        out, new_add = _ref_layer(x, x_add, lp["w"], lp["b"],
                                  lp["gamma"], lp["beta"])
        new_feature_cat = jnp.concatenate([x_cat, new_add], axis=-1)
        x = new_feature_cat
        tail.append(out)
        for o in tail:
            x_add = x_add + o
        features_cat.append(new_add)
        x_cat = jnp.concatenate(features_cat, axis=-1)
    return jnp.transpose(new_feature_cat, (0, 3, 1, 2))


# ------------------------------------ params -------------------------------------- #

def init_params(key, input_channels, num_layers, growth_rate):
    k_res_w, k_res_b, k_layers = jax.random.split(key, 3)
    params = {
        "res_w": 0.1 * jax.random.normal(
            k_res_w, (input_channels, growth_rate), jnp.float32),
        "res_b": 0.05 * jax.random.normal(k_res_b, (growth_rate,), jnp.float32),
        "layers": [],
    }
    lkeys = jax.random.split(k_layers, num_layers)
    for i in range(num_layers):
        cin = input_channels + i * growth_rate
        kw, kb, kg, kbe = jax.random.split(lkeys[i], 4)
        params["layers"].append({
            "w": 0.1 * jax.random.normal(kw, (3, 3, cin, growth_rate), jnp.float32),
            "b": 0.05 * jax.random.normal(kb, (growth_rate,), jnp.float32),
            # PyTorch InstanceNorm2d(affine=True) default init is weight=1, bias=0;
            # perturb them here so the affine path is actually exercised.
            "gamma": 1.0 + 0.1 * jax.random.normal(kg, (growth_rate,), jnp.float32),
            "beta": 0.05 * jax.random.normal(kbe, (growth_rate,), jnp.float32),
        })
    return params


# -------------------------------------- main --------------------------------------- #

if __name__ == "__main__":
    input_channels, num_layers, growth_rate = 4, 3, 8
    N, H, W = 2, 16, 16

    key = jax.random.PRNGKey(0)
    kx, kp = jax.random.split(key)
    x = jax.random.normal(kx, (N, input_channels, H, W), jnp.float32)  # NCHW input
    params = init_params(kp, input_channels, num_layers, growth_rate)

    fwd = jax.jit(dense_block_encoder_forward)
    out = jax.block_until_ready(fwd(x, params))

    expected_channels = input_channels + num_layers * growth_rate
    assert out.shape == (N, expected_channels, H, W), out.shape

    ref = jax.block_until_ready(dense_block_encoder_ref(x, params))
    max_err = float(jnp.max(jnp.abs(out - ref)))
    assert jnp.allclose(out, ref, atol=1e-3, rtol=1e-3), max_err

    print("KERNEL_OK")
</pallas_src>

<mosaic_0001>
module attributes {stable_mosaic.version = 11 : i64} {
  func.func @kernel(%arg0: i32, %arg1: memref<1x8x256xf32, #tpu.memory_space<vmem>>, %arg2: memref<9x256xf32, #tpu.memory_space<vmem>>, %arg3: memref<8x8xf32, #tpu.memory_space<vmem>>, %arg4: memref<8x1xf32, #tpu.memory_space<vmem>>, %arg5: memref<3x8x216xf32, #tpu.memory_space<vmem>>, %arg6: memref<3x8x1xf32, #tpu.memory_space<vmem>>, %arg7: memref<3x8x1xf32, #tpu.memory_space<vmem>>, %arg8: memref<3x8x1xf32, #tpu.memory_space<vmem>>, %arg9: memref<1x32x256xf32, #tpu.memory_space<vmem>>, %arg10: memref<216x256xf32, #tpu.memory_space<vmem>>) attributes {dimension_semantics = [#tpu.dimension_semantics<parallel>], iteration_bounds = array<i64: 2>, scalar_prefetch = 0 : i64, scratch_operands = 1 : i64, tpu.core_type = #tpu.core_type<tc>, window_params = [{transform_indices = @transform_0, window_bounds = array<i64: 1, 8, 256>}, {pipeline_mode = #tpu.pipeline_mode<synchronous>, transform_indices = @transform_1, window_bounds = array<i64: 9, 256>}, {pipeline_mode = #tpu.pipeline_mode<synchronous>, transform_indices = @transform_2, window_bounds = array<i64: 8, 8>}, {pipeline_mode = #tpu.pipeline_mode<synchronous>, transform_indices = @transform_3, window_bounds = array<i64: 8, 1>}, {pipeline_mode = #tpu.pipeline_mode<synchronous>, transform_indices = @transform_4, window_bounds = array<i64: 3, 8, 216>}, {pipeline_mode = #tpu.pipeline_mode<synchronous>, transform_indices = @transform_5, window_bounds = array<i64: 3, 8, 1>}, {pipeline_mode = #tpu.pipeline_mode<synchronous>, transform_indices = @transform_6, window_bounds = array<i64: 3, 8, 1>}, {pipeline_mode = #tpu.pipeline_mode<synchronous>, transform_indices = @transform_7, window_bounds = array<i64: 3, 8, 1>}, {transform_indices = @transform_8, window_bounds = array<i64: 1, 32, 256>}]} {
    %c0 = arith.constant 0 : index
    %c0_0 = arith.constant 0 : index
    %c0_1 = arith.constant 0 : index
    %0 = vector.load %arg1[%c0, %c0_0, %c0_1] : memref<1x8x256xf32, #tpu.memory_space<vmem>>, vector<1x8x256xf32>
    %1 = vector.shape_cast %0 : vector<1x8x256xf32> to vector<8x256xf32>
    %c0_2 = arith.constant 0 : index
    %c0_3 = arith.constant 0 : index
    %c0_4 = arith.constant 0 : index
    %2 = vector.load %arg9[%c0_2, %c0_3, %c0_4] : memref<1x32x256xf32, #tpu.memory_space<vmem>>, vector<1x8x256xf32>
    %3 = vector.shape_cast %2 : vector<1x8x256xf32> to vector<8x256xf32>
    %4 = vector.shape_cast %1 : vector<8x256xf32> to vector<1x8x256xf32>
    tpu.vector_store %arg9[%c0_2, %c0_3, %c0_4], %4 {strides = array<i32>} : memref<1x32x256xf32, #tpu.memory_space<vmem>>, vector<1x8x256xf32>,
    %c0_5 = arith.constant 0 : index
    %c0_6 = arith.constant 0 : index
    %5 = vector.load %arg3[%c0_5, %c0_6] : memref<8x8xf32, #tpu.memory_space<vmem>>, vector<8x8xf32>
    %cst = arith.constant dense<0.000000e+00> : vector<8x256xf32>
    %6 = tpu.matmul %5, %1, %cst {dimension_numbers = #tpu.dot_dimension_numbers<[1], [0], [0], [1], [0, 0, 1, 1], [], []>} : vector<8x8xf32>, vector<8x256xf32>, vector<8x256xf32> -> vector<8x256xf32>
    %c0_7 = arith.constant 0 : index
    %c0_8 = arith.constant 0 : index
    %7 = vector.load %arg4[%c0_7, %c0_8] : memref<8x1xf32, #tpu.memory_space<vmem>>, vector<8x1xf32>
    %8 = vector.broadcast %7 : vector<8x1xf32> to vector<8x256xf32>
    %9 = arith.addf %6, %8 : vector<8x256xf32>
    %cst_9 = arith.constant 0.000000e+00 : f32
    %10 = vector.broadcast %cst_9 : f32 to vector<8x256xf32>
    %c17_i32 = arith.constant 17 : i32
    %11 = tpu.dynamic_rotate %1 by %c17_i32 dim 1 : vector<8x256xf32>, i32 -> vector<8x256xf32>
    %c0_10 = arith.constant 0 : index
    %c0_11 = arith.constant 0 : index
    %12 = vector.load %arg2[%c0_10, %c0_11] : memref<9x256xf32, #tpu.memory_space<vmem>>, vector<1x256xf32>
    %13 = vector.broadcast %12 : vector<1x256xf32> to vector<8x256xf32>
    %14 = arith.mulf %11, %13 : vector<8x256xf32>
    %c0_12 = arith.constant 0 : index
    %c0_13 = arith.constant 0 : index
    %15 = vector.load %arg10[%c0_12, %c0_13] : memref<216x256xf32, #tpu.memory_space<vmem>>, vector<8x256xf32>
    tpu.vector_store %arg10[%c0_12, %c0_13], %14 {strides = array<i32>} : memref<216x256xf32, #tpu.memory_space<vmem>>, vector<8x256xf32>,
    %c16_i32 = arith.constant 16 : i32
    %16 = tpu.dynamic_rotate %1 by %c16_i32 dim 1 : vector<8x256xf32>, i32 -> vector<8x256xf32>
    %c1 = arith.constant 1 : index
    %c0_14 = arith.constant 0 : index
    %17 = vector.load %arg2[%c1, %c0_14] : memref<9x256xf32, #tpu.memory_space<vmem>>, vector<1x256xf32>
    %18 = vector.broadcast %17 : vector<1x256xf32> to vector<8x256xf32>
    %19 = arith.mulf %16, %18 : vector<8x256xf32>
    %c8 = arith.constant 8 : index
    %c0_15 = arith.constant 0 : index
    %20 = vector.load %arg10[%c8, %c0_15] : memref<216x256xf32, #tpu.memory_space<vmem>>, vector<8x256xf32>
    tpu.vector_store %arg10[%c8, %c0_15], %19 {strides = array<i32>} : memref<216x256xf32, #tpu.memory_space<vmem>>, vector<8x256xf32>,
    %c15_i32 = arith.constant 15 : i32
    %21 = tpu.dynamic_rotate %1 by %c15_i32 dim 1 : vector<8x256xf32>, i32 -> vector<8x256xf32>
    %c2 = arith.constant 2 : index
    %c0_16 = arith.constant 0 : index
    %22 = vector.load %arg2[%c2, %c0_16] : memref<9x256xf32, #tpu.memory_space<vmem>>, vector<1x256xf32>
    %23 = vector.broadcast %22 : vector<1x256xf32> to vector<8x256xf32>
    %24 = arith.mulf %21, %23 : vector<8x256xf32>
    %c16 = arith.constant 16 : index
    %c0_17 = arith.constant 0 : index
    %25 = vector.load %arg10[%c16, %c0_17] : memref<216x256xf32, #tpu.memory_space<vmem>>, vector<8x256xf32>
    tpu.vector_store %arg10[%c16, %c0_17], %24 {strides = array<i32>} : memref<216x256xf32, #tpu.memory_space<vmem>>, vector<8x256xf32>,
    %c1_i32 = arith.constant 1 : i32
    %26 = tpu.dynamic_rotate %1 by %c1_i32 dim 1 : vector<8x256xf32>, i32 -> vector<8x256xf32>
    %c3 = arith.constant 3 : index
    %c0_18 = arith.constant 0 : index
    %27 = vector.load %arg2[%c3, %c0_18] : memref<9x256xf32, #tpu.memory_space<vmem>>, vector<1x256xf32>
    %28 = vector.broadcast %27 : vector<1x256xf32> to vector<8x256xf32>
    %29 = arith.mulf %26, %28 : vector<8x256xf32>
    %c24 = arith.constant 24 : index
    %c0_19 = arith.constant 0 : index
    %30 = vector.load %arg10[%c24, %c0_19] : memref<216x256xf32, #tpu.memory_space<vmem>>, vector<8x256xf32>
    tpu.vector_store %arg10[%c24, %c0_19], %29 {strides = array<i32>} : memref<216x256xf32, #tpu.memory_space<vmem>>, vector<8x256xf32>,
    %c32 = arith.constant 32 : index
    %c0_20 = arith.constant 0 : index
    %31 = vector.load %arg10[%c32, %c0_20] : memref<216x256xf32, #tpu.memory_space<vmem>>, vector<8x256xf32>
    tpu.vector_store %arg10[%c32, %c0_20], %1 {strides = array<i32>} : memref<216x256xf32, #tpu.memory_space<vmem>>, vector<8x256xf32>,
    %c255_i32 = arith.constant 255 : i32
    %32 = tpu.dynamic_rotate %1 by %c255_i32 dim 1 : vector<8x256xf32>, i32 -> vector<8x256xf32>
    %c5 = arith.constant 5 : index
    %c0_21 = arith.constant 0 : index
    %33 = vector.load %arg2[%c5, %c0_21] : memref<9x256xf32, #tpu.memory_space<vmem>>, vector<1x256xf32>
    %34 = vector.broadcast %33 : vector<1x256xf32> to vector<8x256xf32>
    %35 = arith.mulf %32, %34 : vector<8x256xf32>
    %c40 = arith.constant 40 : index
    %c0_22 = arith.constant 0 : index
    %36 = vector.load %arg10[%c40, %c0_22] : memref<216x256xf32, #tpu.memory_space<vmem>>, vector<8x256xf32>
    tpu.vector_store %arg10[%c40, %c0_22], %35 {strides = array<i32>} : memref<216x256xf32, #tpu.memory_space<vmem>>, vector<8x256xf32>,
    %c241_i32 = arith.constant 241 : i32
    %37 = tpu.dynamic_rotate %1 by %c241_i32 dim 1 : vector<8x256xf32>, i32 -> vector<8x256xf32>
    %c6 = arith.constant 6 : index
    %c0_23 = arith.constant 0 : index
    %38 = vector.load %arg2[%c6, %c0_23] : memref<9x256xf32, #tpu.memory_space<vmem>>, vector<1x256xf32>
    %39 = vector.broadcast %38 : vector<1x256xf32> to vector<8x256xf32>
    %40 = arith.mulf %37, %39 : vector<8x256xf32>
    %c48 = arith.constant 48 : index
    %c0_24 = arith.constant 0 : index
    %41 = vector.load %arg10[%c48, %c0_24] : memref<216x256xf32, #tpu.memory_space<vmem>>, vector<8x256xf32>
    tpu.vector_store %arg10[%c48, %c0_24], %40 {strides = array<i32>} : memref<216x256xf32, #tpu.memory_space<vmem>>, vector<8x256xf32>,
    %c240_i32 = arith.constant 240 : i32
    %42 = tpu.dynamic_rotate %1 by %c240_i32 dim 1 : vector<8x256xf32>, i32 -> vector<8x256xf32>
    %c7 = arith.constant 7 : index
    %c0_25 = arith.constant 0 : index
    %43 = vector.load %arg2[%c7, %c0_25] : memref<9x256xf32, #tpu.memory_space<vmem>>, vector<1x256xf32>
    %44 = vector.broadcast %43 : vector<1x256xf32> to vector<8x256xf32>
    %45 = arith.mulf %42, %44 : vector<8x256xf32>
    %c56 = arith.constant 56 : index
    %c0_26 = arith.constant 0 : index
    %46 = vector.load %arg10[%c56, %c0_26] : memref<216x256xf32, #tpu.memory_space<vmem>>, vector<8x256xf32>
    tpu.vector_store %arg10[%c56, %c0_26], %45 {strides = array<i32>} : memref<216x256xf32, #tpu.memory_space<vmem>>, vector<8x256xf32>,
    %c239_i32 = arith.constant 239 : i32
    %47 = tpu.dynamic_rotate %1 by %c239_i32 dim 1 : vector<8x256xf32>, i32 -> vector<8x256xf32>
    %c8_27 = arith.constant 8 : index
    %c0_28 = arith.constant 0 : index
    %48 = vector.load %arg2[%c8_27, %c0_28] : memref<9x256xf32, #tpu.memory_space<vmem>>, vector<1x256xf32>
    %49 = vector.broadcast %48 : vector<1x256xf32> to vector<8x256xf32>
    %50 = arith.mulf %47, %49 : vector<8x256xf32>
    %c64 = arith.constant 64 : index
    %c0_29 = arith.constant 0 : index
    %51 = vector.load %arg10[%c64, %c0_29] : memref<216x256xf32, #tpu.memory_space<vmem>>, vector<8x256xf32>
    tpu.vector_store %arg10[%c64, %c0_29], %50 {strides = array<i32>} : memref<216x256xf32, #tpu.memory_space<vmem>>, vector<8x256xf32>,
    %c0_30 = arith.constant 0 : index
    %c0_31 = arith.constant 0 : index
    %c0_32 = arith.constant 0 : index
    %52 = vector.load %arg5[%c0_30, %c0_31, %c0_32] : memref<3x8x216xf32, #tpu.memory_space<vmem>>, vector<1x8x216xf32>
    %53 = vector.shape_cast %52 : vector<1x8x216xf32> to vector<8x216xf32>
    %54 = vector.extract_strided_slice %53 {offsets = [0, 0], sizes = [8, 72], strides = [1, 1]} : vector<8x216xf32> to vector<8x72xf32>
    %c0_33 = arith.constant 0 : index
    %c0_34 = arith.constant 0 : index
    %55 = vector.load %arg10[%c0_33, %c0_34] : memref<216x256xf32, #tpu.memory_space<vmem>>, vector<72x256xf32>
    %cst_35 = arith.constant dense<0.000000e+00> : vector<8x256xf32>
    %56 = tpu.matmul %54, %55, %cst_35 {dimension_numbers = #tpu.dot_dimension_numbers<[1], [0], [0], [1], [0, 0, 1, 1], [], []>} : vector<8x72xf32>, vector<72x256xf32>, vector<8x256xf32> -> vector<8x256xf32>
    %c0_36 = arith.constant 0 : index
    %c0_37 = arith.constant 0 : index
    %c0_38 = arith.constant 0 : index
    %57 = vector.load %arg6[%c0_36, %c0_37, %c0_38] : memref<3x8x1xf32, #tpu.memory_space<vmem>>, vector<1x8x1xf32>
    %58 = vector.shape_cast %57 : vector<1x8x1xf32> to vector<8x1xf32>
    %59 = vector.broadcast %58 : vector<8x1xf32> to vector<8x256xf32>
    %60 = arith.addf %56, %59 : vector<8x256xf32>
    %cst_39 = arith.constant 0.000000e+00 : f32
    %61 = vector.broadcast %cst_39 : f32 to vector<8x256xf32>
    %62 = arith.cmpf ogt, %60, %61 : vector<8x256xf32>
    %cst_40 = arith.constant 2.000000e-01 : f32
    %63 = vector.broadcast %cst_40 : f32 to vector<8x256xf32>
    %64 = arith.mulf %63, %60 : vector<8x256xf32>
    %65 = arith.select %62, %60, %64 : vector<8x256xi1>, vector<8x256xf32>
    %cst_41 = arith.constant dense<0.000000e+00> : vector<8xf32>
    %66 = vector.multi_reduction <add>, %65, %cst_41 [1] : vector<8x256xf32> to vector<8xf32>
    %67 = vector.shape_cast %66 : vector<8xf32> to vector<8x1xf32>
    %cst_42 = arith.constant 2.560000e+02 : f32
    %68 = vector.broadcast %cst_42 : f32 to vector<8x1xf32>
    %69 = arith.divf %67, %68 : vector<8x1xf32>
    %70 = vector.broadcast %69 : vector<8x1xf32> to vector<8x256xf32>
    %71 = arith.subf %65, %70 : vector<8x256xf32>
    %72 = arith.mulf %71, %71 : vector<8x256xf32>
    %cst_43 = arith.constant dense<0.000000e+00> : vector<8xf32>
    %73 = vector.multi_reduction <add>, %72, %cst_43 [1] : vector<8x256xf32> to vector<8xf32>
    %74 = vector.shape_cast %73 : vector<8xf32> to vector<8x1xf32>
    %cst_44 = arith.constant 2.560000e+02 : f32
    %75 = vector.broadcast %cst_44 : f32 to vector<8x1xf32>
    %76 = arith.divf %74, %75 : vector<8x1xf32>
    %c0_45 = arith.constant 0 : index
    %c0_46 = arith.constant 0 : index
    %c0_47 = arith.constant 0 : index
    %77 = vector.load %arg7[%c0_45, %c0_46, %c0_47] : memref<3x8x1xf32, #tpu.memory_space<vmem>>, vector<1x8x1xf32>
    %78 = vector.shape_cast %77 : vector<1x8x1xf32> to vector<8x1xf32>
    %cst_48 = arith.constant 9.99999993E-9 : f32
    %79 = vector.broadcast %cst_48 : f32 to vector<8x1xf32>
    %80 = arith.addf %76, %79 : vector<8x1xf32>
    %81 = math.rsqrt %80 : vector<8x1xf32>
    %82 = arith.mulf %78, %81 : vector<8x1xf32>
    %83 = vector.broadcast %82 : vector<8x1xf32> to vector<8x256xf32>
    %84 = arith.mulf %71, %83 : vector<8x256xf32>
    %c0_49 = arith.constant 0 : index
    %c0_50 = arith.constant 0 : index
    %c0_51 = arith.constant 0 : index
    %85 = vector.load %arg8[%c0_49, %c0_50, %c0_51] : memref<3x8x1xf32, #tpu.memory_space<vmem>>, vector<1x8x1xf32>
    %86 = vector.shape_cast %85 : vector<1x8x1xf32> to vector<8x1xf32>
    %87 = vector.broadcast %86 : vector<8x1xf32> to vector<8x256xf32>
    %88 = arith.addf %84, %87 : vector<8x256xf32>
    %89 = arith.addf %9, %88 : vector<8x256xf32>
    %c0_52 = arith.constant 0 : index
    %c8_53 = arith.constant 8 : index
    %c0_54 = arith.constant 0 : index
    %90 = vector.load %arg9[%c0_52, %c8_53, %c0_54] : memref<1x32x256xf32, #tpu.memory_space<vmem>>, vector<1x8x256xf32>
    %91 = vector.shape_cast %90 : vector<1x8x256xf32> to vector<8x256xf32>
    %92 = vector.shape_cast %89 : vector<8x256xf32> to vector<1x8x256xf32>
    tpu.vector_store %arg9[%c0_52, %c8_53, %c0_54], %92 {strides = array<i32>} : memref<1x32x256xf32, #tpu.memory_space<vmem>>, vector<1x8x256xf32>,
    %93 = arith.addf %10, %88 : vector<8x256xf32>
    %94 = arith.addf %9, %93 : vector<8x256xf32>
    %c17_i32_55 = arith.constant 17 : i32
    %95 = tpu.dynamic_rotate %89 by %c17_i32_55 dim 1 : vector<8x256xf32>, i32 -> vector<8x256xf32>
    %c0_56 = arith.constant 0 : index
    %c0_57 = arith.constant 0 : index
    %96 = vector.load %arg2[%c0_56, %c0_57] : memref<9x256xf32, #tpu.memory_space<vmem>>, vector<1x256xf32>
    %97 = vector.broadcast %96 : vector<1x256xf32> to vector<8x256xf32>
    %98 = arith.mulf %95, %97 : vector<8x256xf32>
    %c72 = arith.constant 72 : index
    %c0_58 = arith.constant 0 : index
    %99 = vector.load %arg10[%c72, %c0_58] : memref<216x256xf32, #tpu.memory_space<vmem>>, vector<8x256xf32>
    tpu.vector_store %arg10[%c72, %c0_58], %98 {strides = array<i32>} : memref<216x256xf32, #tpu.memory_space<vmem>>, vector<8x256xf32>,
    %c16_i32_59 = arith.constant 16 : i32
    %100 = tpu.dynamic_rotate %89 by %c16_i32_59 dim 1 : vector<8x256xf32>, i32 -> vector<8x256xf32>
    %c1_60 = arith.constant 1 : index
    %c0_61 = arith.constant 0 : index
    %101 = vector.load %arg2[%c1_60, %c0_61] : memref<9x256xf32, #tpu.memory_space<vmem>>, vector<1x256xf32>
    %102 = vector.broadcast %101 : vector<1x256xf32> to vector<8x256xf32>
    %103 = arith.mulf %100, %102 : vector<8x256xf32>
    %c80 = arith.constant 80 : index
    %c0_62 = arith.constant 0 : index
    %104 = vector.load %arg10[%c80, %c0_62] : memref<216x256xf32, #tpu.memory_space<vmem>>, vector<8x256xf32>
    tpu.vector_store %arg10[%c80, %c0_62], %103 {strides = array<i32>} : memref<216x256xf32, #tpu.memory_space<vmem>>, vector<8x256xf32>,
    %c15_i32_63 = arith.constant 15 : i32
    %105 = tpu.dynamic_rotate %89 by %c15_i32_63 dim 1 : vector<8x256xf32>, i32 -> vector<8x256xf32>
    %c2_64 = arith.constant 2 : index
    %c0_65 = arith.constant 0 : index
    %106 = vector.load %arg2[%c2_64, %c0_65] : memref<9x256xf32, #tpu.memory_space<vmem>>, vector<1x256xf32>
    %107 = vector.broadcast %106 : vector<1x256xf32> to vector<8x256xf32>
    %108 = arith.mulf %105, %107 : vector<8x256xf32>
    %c88 = arith.constant 88 : index
    %c0_66 = arith.constant 0 : index
    %109 = vector.load %arg10[%c88, %c0_66] : memref<216x256xf32, #tpu.memory_space<vmem>>, vector<8x256xf32>
    tpu.vector_store %arg10[%c88, %c0_66], %108 {strides = array<i32>} : memref<216x256xf32, #tpu.memory_space<vmem>>, vector<8x256xf32>,
    %c1_i32_67 = arith.constant 1 : i32
    %110 = tpu.dynamic_rotate %89 by %c1_i32_67 dim 1 : vector<8x256xf32>, i32 -> vector<8x256xf32>
    %c3_68 = arith.constant 3 : index
    %c0_69 = arith.constant 0 : index
    %111 = vector.load %arg2[%c3_68, %c0_69] : memref<9x256xf32, #tpu.memory_space<vmem>>, vector<1x256xf32>
    %112 = vector.broadcast %111 : vector<1x256xf32> to vector<8x256xf32>
    %113 = arith.mulf %110, %112 : vector<8x256xf32>
    %c96 = arith.constant 96 : index
    %c0_70 = arith.constant 0 : index
    %114 = vector.load %arg10[%c96, %c0_70] : memref<216x256xf32, #tpu.memory_space<vmem>>, vector<8x256xf32>
    tpu.vector_store %arg10[%c96, %c0_70], %113 {strides = array<i32>} : memref<216x256xf32, #tpu.memory_space<vmem>>, vector<8x256xf32>,
    %c104 = arith.constant 104 : index
    %c0_71 = arith.constant 0 : index
    %115 = vector.load %arg10[%c104, %c0_71] : memref<216x256xf32, #tpu.memory_space<vmem>>, vector<8x256xf32>
    tpu.vector_store %arg10[%c104, %c0_71], %89 {strides = array<i32>} : memref<216x256xf32, #tpu.memory_space<vmem>>, vector<8x256xf32>,
    %c255_i32_72 = arith.constant 255 : i32
    %116 = tpu.dynamic_rotate %89 by %c255_i32_72 dim 1 : vector<8x256xf32>, i32 -> vector<8x256xf32>
    %c5_73 = arith.constant 5 : index
    %c0_74 = arith.constant 0 : index
    %117 = vector.load %arg2[%c5_73, %c0_74] : memref<9x256xf32, #tpu.memory_space<vmem>>, vector<1x256xf32>
    %118 = vector.broadcast %117 : vector<1x256xf32> to vector<8x256xf32>
    %119 = arith.mulf %116, %118 : vector<8x256xf32>
    %c112 = arith.constant 112 : index
    %c0_75 = arith.constant 0 : index
    %120 = vector.load %arg10[%c112, %c0_75] : memref<216x256xf32, #tpu.memory_space<vmem>>, vector<8x256xf32>
    tpu.vector_store %arg10[%c112, %c0_75], %119 {strides = array<i32>} : memref<216x256xf32, #tpu.memory_space<vmem>>, vector<8x256xf32>,
    %c241_i32_76 = arith.constant 241 : i32
    %121 = tpu.dynamic_rotate %89 by %c241_i32_76 dim 1 : vector<8x256xf32>, i32 -> vector<8x256xf32>
    %c6_77 = arith.constant 6 : index
    %c0_78 = arith.constant 0 : index
    %122 = vector.load %arg2[%c6_77, %c0_78] : memref<9x256xf32, #tpu.memory_space<vmem>>, vector<1x256xf32>
    %123 = vector.broadcast %122 : vector<1x256xf32> to vector<8x256xf32>
    %124 = arith.mulf %121, %123 : vector<8x256xf32>
    %c120 = arith.constant 120 : index
    %c0_79 = arith.constant 0 : index
    %125 = vector.load %arg10[%c120, %c0_79] : memref<216x256xf32, #tpu.memory_space<vmem>>, vector<8x256xf32>
    tpu.vector_store %arg10[%c120, %c0_79], %124 {strides = array<i32>} : memref<216x256xf32, #tpu.memory_space<vmem>>, vector<8x256xf32>,
    %c240_i32_80 = arith.constant 240 : i32
    %126 = tpu.dynamic_rotate %89 by %c240_i32_80 dim 1 : vector<8x256xf32>, i32 -> vector<8x256xf32>
    %c7_81 = arith.constant 7 : index
    %c0_82 = arith.constant 0 : index
    %127 = vector.load %arg2[%c7_81, %c0_82] : memref<9x256xf32, #tpu.memory_space<vmem>>, vector<1x256xf32>
    %128 = vector.broadcast %127 : vector<1x256xf32> to vector<8x256xf32>
    %129 = arith.mulf %126, %128 : vector<8x256xf32>
    %c128 = arith.constant 128 : index
    %c0_83 = arith.constant 0 : index
    %130 = vector.load %arg10[%c128, %c0_83] : memref<216x256xf32, #tpu.memory_space<vmem>>, vector<8x256xf32>
    tpu.vector_store %arg10[%c128, %c0_83], %129 {strides = array<i32>} : memref<216x256xf32, #tpu.memory_space<vmem>>, vector<8x256xf32>,
    %c239_i32_84 = arith.constant 239 : i32
    %131 = tpu.dynamic_rotate %89 by %c239_i32_84 dim 1 : vector<8x256xf32>, i32 -> vector<8x256xf32>
    %c8_85 = arith.constant 8 : index
    %c0_86 = arith.constant 0 : index
    %132 = vector.load %arg2[%c8_85, %c0_86] : memref<9x256xf32, #tpu.memory_space<vmem>>, vector<1x256xf32>
    %133 = vector.broadcast %132 : vector<1x256xf32> to vector<8x256xf32>
    %134 = arith.mulf %131, %133 : vector<8x256xf32>
    %c136 = arith.constant 136 : index
    %c0_87 = arith.constant 0 : index
    %135 = vector.load %arg10[%c136, %c0_87] : memref<216x256xf32, #tpu.memory_space<vmem>>, vector<8x256xf32>
    tpu.vector_store %arg10[%c136, %c0_87], %134 {strides = array<i32>} : memref<216x256xf32, #tpu.memory_space<vmem>>, vector<8x256xf32>,
    %c1_88 = arith.constant 1 : index
    %c0_89 = arith.constant 0 : index
    %c0_90 = arith.constant 0 : index
    %136 = vector.load %arg5[%c1_88, %c0_89, %c0_90] : memref<3x8x216xf32, #tpu.memory_space<vmem>>, vector<1x8x216xf32>
    %137 = vector.shape_cast %136 : vector<1x8x216xf32> to vector<8x216xf32>
    %138 = vector.extract_strided_slice %137 {offsets = [0, 0], sizes = [8, 144], strides = [1, 1]} : vector<8x216xf32> to vector<8x144xf32>
    %c0_91 = arith.constant 0 : index
    %c0_92 = arith.constant 0 : index
    %139 = vector.load %arg10[%c0_91, %c0_92] : memref<216x256xf32, #tpu.memory_space<vmem>>, vector<144x256xf32>
    %cst_93 = arith.constant dense<0.000000e+00> : vector<8x256xf32>
    %140 = tpu.matmul %138, %139, %cst_93 {dimension_numbers = #tpu.dot_dimension_numbers<[1], [0], [0], [1], [0, 0, 1, 1], [], []>} : vector<8x144xf32>, vector<144x256xf32>, vector<8x256xf32> -> vector<8x256xf32>
    %c1_94 = arith.constant 1 : index
    %c0_95 = arith.constant 0 : index
    %c0_96 = arith.constant 0 : index
    %141 = vector.load %arg6[%c1_94, %c0_95, %c0_96] : memref<3x8x1xf32, #tpu.memory_space<vmem>>, vector<1x8x1xf32>
    %142 = vector.shape_cast %141 : vector<1x8x1xf32> to vector<8x1xf32>
    %143 = vector.broadcast %142 : vector<8x1xf32> to vector<8x256xf32>
    %144 = arith.addf %140, %143 : vector<8x256xf32>
    %cst_97 = arith.constant 0.000000e+00 : f32
    %145 = vector.broadcast %cst_97 : f32 to vector<8x256xf32>
    %146 = arith.cmpf ogt, %144, %145 : vector<8x256xf32>
    %cst_98 = arith.constant 2.000000e-01 : f32
    %147 = vector.broadcast %cst_98 : f32 to vector<8x256xf32>
    %148 = arith.mulf %147, %144 : vector<8x256xf32>
    %149 = arith.select %146, %144, %148 : vector<8x256xi1>, vector<8x256xf32>
    %cst_99 = arith.constant dense<0.000000e+00> : vector<8xf32>
    %150 = vector.multi_reduction <add>, %149, %cst_99 [1] : vector<8x256xf32> to vector<8xf32>
    %151 = vector.shape_cast %150 : vector<8xf32> to vector<8x1xf32>
    %cst_100 = arith.constant 2.560000e+02 : f32
    %152 = vector.broadcast %cst_100 : f32 to vector<8x1xf32>
    %153 = arith.divf %151, %152 : vector<8x1xf32>
    %154 = vector.broadcast %153 : vector<8x1xf32> to vector<8x256xf32>
    %155 = arith.subf %149, %154 : vector<8x256xf32>
    %156 = arith.mulf %155, %155 : vector<8x256xf32>
    %cst_101 = arith.constant dense<0.000000e+00> : vector<8xf32>
    %157 = vector.multi_reduction <add>, %156, %cst_101 [1] : vector<8x256xf32> to vector<8xf32>
    %158 = vector.shape_cast %157 : vector<8xf32> to vector<8x1xf32>
    %cst_102 = arith.constant 2.560000e+02 : f32
    %159 = vector.broadcast %cst_102 : f32 to vector<8x1xf32>
    %160 = arith.divf %158, %159 : vector<8x1xf32>
    %c1_103 = arith.constant 1 : index
    %c0_104 = arith.constant 0 : index
    %c0_105 = arith.constant 0 : index
    %161 = vector.load %arg7[%c1_103, %c0_104, %c0_105] : memref<3x8x1xf32, #tpu.memory_space<vmem>>, vector<1x8x1xf32>
    %162 = vector.shape_cast %161 : vector<1x8x1xf32> to vector<8x1xf32>
    %cst_106 = arith.constant 9.99999993E-9 : f32
    %163 = vector.broadcast %cst_106 : f32 to vector<8x1xf32>
    %164 = arith.addf %160, %163 : vector<8x1xf32>
    %165 = math.rsqrt %164 : vector<8x1xf32>
    %166 = arith.mulf %162, %165 : vector<8x1xf32>
    %167 = vector.broadcast %166 : vector<8x1xf32> to vector<8x256xf32>
    %168 = arith.mulf %155, %167 : vector<8x256xf32>
    %c1_107 = arith.constant 1 : index
    %c0_108 = arith.constant 0 : index
    %c0_109 = arith.constant 0 : index
    %169 = vector.load %arg8[%c1_107, %c0_108, %c0_109] : memref<3x8x1xf32, #tpu.memory_space<vmem>>, vector<1x8x1xf32>
    %170 = vector.shape_cast %169 : vector<1x8x1xf32> to vector<8x1xf32>
    %171 = vector.broadcast %170 : vector<8x1xf32> to vector<8x256xf32>
    %172 = arith.addf %168, %171 : vector<8x256xf32>
    %173 = arith.addf %94, %172 : vector<8x256xf32>
    %c0_110 = arith.constant 0 : index
    %c16_111 = arith.constant 16 : index
    %c0_112 = arith.constant 0 : index
    %174 = vector.load %arg9[%c0_110, %c16_111, %c0_112] : memref<1x32x256xf32, #tpu.memory_space<vmem>>, vector<1x8x256xf32>
    %175 = vector.shape_cast %174 : vector<1x8x256xf32> to vector<8x256xf32>
    %176 = vector.shape_cast %173 : vector<8x256xf32> to vector<1x8x256xf32>
    tpu.vector_store %arg9[%c0_110, %c16_111, %c0_112], %176 {strides = array<i32>} : memref<1x32x256xf32, #tpu.memory_space<vmem>>, vector<1x8x256xf32>,
    %177 = arith.addf %93, %172 : vector<8x256xf32>
    %178 = arith.addf %94, %177 : vector<8x256xf32>
    %c17_i32_113 = arith.constant 17 : i32
    %179 = tpu.dynamic_rotate %173 by %c17_i32_113 dim 1 : vector<8x256xf32>, i32 -> vector<8x256xf32>
    %c0_114 = arith.constant 0 : index
    %c0_115 = arith.constant 0 : index
    %180 = vector.load %arg2[%c0_114, %c0_115] : memref<9x256xf32, #tpu.memory_space<vmem>>, vector<1x256xf32>
    %181 = vector.broadcast %180 : vector<1x256xf32> to vector<8x256xf32>
    %182 = arith.mulf %179, %181 : vector<8x256xf32>
    %c144 = arith.constant 144 : index
    %c0_116 = arith.constant 0 : index
    %183 = vector.load %arg10[%c144, %c0_116] : memref<216x256xf32, #tpu.memory_space<vmem>>, vector<8x256xf32>
    tpu.vector_store %arg10[%c144, %c0_116], %182 {strides = array<i32>} : memref<216x256xf32, #tpu.memory_space<vmem>>, vector<8x256xf32>,
    %c16_i32_117 = arith.constant 16 : i32
    %184 = tpu.dynamic_rotate %173 by %c16_i32_117 dim 1 : vector<8x256xf32>, i32 -> vector<8x256xf32>
    %c1_118 = arith.constant 1 : index
    %c0_119 = arith.constant 0 : index
    %185 = vector.load %arg2[%c1_118, %c0_119] : memref<9x256xf32, #tpu.memory_space<vmem>>, vector<1x256xf32>
    %186 = vector.broadcast %185 : vector<1x256xf32> to vector<8x256xf32>
    %187 = arith.mulf %184, %186 : vector<8x256xf32>
    %c152 = arith.constant 152 : index
    %c0_120 = arith.constant 0 : index
    %188 = vector.load %arg10[%c152, %c0_120] : memref<216x256xf32, #tpu.memory_space<vmem>>, vector<8x256xf32>
    tpu.vector_store %arg10[%c152, %c0_120], %187 {strides = array<i32>} : memref<216x256xf32, #tpu.memory_space<vmem>>, vector<8x256xf32>,
    %c15_i32_121 = arith.constant 15 : i32
    %189 = tpu.dynamic_rotate %173 by %c15_i32_121 dim 1 : vector<8x256xf32>, i32 -> vector<8x256xf32>
    %c2_122 = arith.constant 2 : index
    %c0_123 = arith.constant 0 : index
    %190 = vector.load %arg2[%c2_122, %c0_123] : memref<9x256xf32, #tpu.memory_space<vmem>>, vector<1x256xf32>
    %191 = vector.broadcast %190 : vector<1x256xf32> to vector<8x256xf32>
    %192 = arith.mulf %189, %191 : vector<8x256xf32>
    %c160 = arith.constant 160 : index
    %c0_124 = arith.constant 0 : index
    %193 = vector.load %arg10[%c160, %c0_124] : memref<216x256xf32, #tpu.memory_space<vmem>>, vector<8x256xf32>
    tpu.vector_store %arg10[%c160, %c0_124], %192 {strides = array<i32>} : memref<216x256xf32, #tpu.memory_space<vmem>>, vector<8x256xf32>,
    %c1_i32_125 = arith.constant 1 : i32
    %194 = tpu.dynamic_rotate %173 by %c1_i32_125 dim 1 : vector<8x256xf32>, i32 -> vector<8x256xf32>
    %c3_126 = arith.constant 3 : index
    %c0_127 = arith.constant 0 : index
    %195 = vector.load %arg2[%c3_126, %c0_127] : memref<9x256xf32, #tpu.memory_space<vmem>>, vector<1x256xf32>
    %196 = vector.broadcast %195 : vector<1x256xf32> to vector<8x256xf32>
    %197 = arith.mulf %194, %196 : vector<8x256xf32>
    %c168 = arith.constant 168 : index
    %c0_128 = arith.constant 0 : index
    %198 = vector.load %arg10[%c168, %c0_128] : memref<216x256xf32, #tpu.memory_space<vmem>>, vector<8x256xf32>
    tpu.vector_store %arg10[%c168, %c0_128], %197 {strides = array<i32>} : memref<216x256xf32, #tpu.memory_space<vmem>>, vector<8x256xf32>,
    %c176 = arith.constant 176 : index
    %c0_129 = arith.constant 0 : index
    %199 = vector.load %arg10[%c176, %c0_129] : memref<216x256xf32, #tpu.memory_space<vmem>>, vector<8x256xf32>
    tpu.vector_store %arg10[%c176, %c0_129], %173 {strides = array<i32>} : memref<216x256xf32, #tpu.memory_space<vmem>>, vector<8x256xf32>,
    %c255_i32_130 = arith.constant 255 : i32
    %200 = tpu.dynamic_rotate %173 by %c255_i32_130 dim 1 : vector<8x256xf32>, i32 -> vector<8x256xf32>
    %c5_131 = arith.constant 5 : index
    %c0_132 = arith.constant 0 : index
    %201 = vector.load %arg2[%c5_131, %c0_132] : memref<9x256xf32, #tpu.memory_space<vmem>>, vector<1x256xf32>
    %202 = vector.broadcast %201 : vector<1x256xf32> to vector<8x256xf32>
    %203 = arith.mulf %200, %202 : vector<8x256xf32>
    %c184 = arith.constant 184 : index
    %c0_133 = arith.constant 0 : index
    %204 = vector.load %arg10[%c184, %c0_133] : memref<216x256xf32, #tpu.memory_space<vmem>>, vector<8x256xf32>
    tpu.vector_store %arg10[%c184, %c0_133], %203 {strides = array<i32>} : memref<216x256xf32, #tpu.memory_space<vmem>>, vector<8x256xf32>,
    %c241_i32_134 = arith.constant 241 : i32
    %205 = tpu.dynamic_rotate %173 by %c241_i32_134 dim 1 : vector<8x256xf32>, i32 -> vector<8x256xf32>
    %c6_135 = arith.constant 6 : index
    %c0_136 = arith.constant 0 : index
    %206 = vector.load %arg2[%c6_135, %c0_136] : memref<9x256xf32, #tpu.memory_space<vmem>>, vector<1x256xf32>
    %207 = vector.broadcast %206 : vector<1x256xf32> to vector<8x256xf32>
    %208 = arith.mulf %205, %207 : vector<8x256xf32>
    %c192 = arith.constant 192 : index
    %c0_137 = arith.constant 0 : index
    %209 = vector.load %arg10[%c192, %c0_137] : memref<216x256xf32, #tpu.memory_space<vmem>>, vector<8x256xf32>
    tpu.vector_store %arg10[%c192, %c0_137], %208 {strides = array<i32>} : memref<216x256xf32, #tpu.memory_space<vmem>>, vector<8x256xf32>,
    %c240_i32_138 = arith.constant 240 : i32
    %210 = tpu.dynamic_rotate %173 by %c240_i32_138 dim 1 : vector<8x256xf32>, i32 -> vector<8x256xf32>
    %c7_139 = arith.constant 7 : index
    %c0_140 = arith.constant 0 : index
    %211 = vector.load %arg2[%c7_139, %c0_140] : memref<9x256xf32, #tpu.memory_space<vmem>>, vector<1x256xf32>
    %212 = vector.broadcast %211 : vector<1x256xf32> to vector<8x256xf32>
    %213 = arith.mulf %210, %212 : vector<8x256xf32>
    %c200 = arith.constant 200 : index
    %c0_141 = arith.constant 0 : index
    %214 = vector.load %arg10[%c200, %c0_141] : memref<216x256xf32, #tpu.memory_space<vmem>>, vector<8x256xf32>
    tpu.vector_store %arg10[%c200, %c0_141], %213 {strides = array<i32>} : memref<216x256xf32, #tpu.memory_space<vmem>>, vector<8x256xf32>,
    %c239_i32_142 = arith.constant 239 : i32
    %215 = tpu.dynamic_rotate %173 by %c239_i32_142 dim 1 : vector<8x256xf32>, i32 -> vector<8x256xf32>
    %c8_143 = arith.constant 8 : index
    %c0_144 = arith.constant 0 : index
    %216 = vector.load %arg2[%c8_143, %c0_144] : memref<9x256xf32, #tpu.memory_space<vmem>>, vector<1x256xf32>
    %217 = vector.broadcast %216 : vector<1x256xf32> to vector<8x256xf32>
    %218 = arith.mulf %215, %217 : vector<8x256xf32>
    %c208 = arith.constant 208 : index
    %c0_145 = arith.constant 0 : index
    %219 = vector.load %arg10[%c208, %c0_145] : memref<216x256xf32, #tpu.memory_space<vmem>>, vector<8x256xf32>
    tpu.vector_store %arg10[%c208, %c0_145], %218 {strides = array<i32>} : memref<216x256xf32, #tpu.memory_space<vmem>>, vector<8x256xf32>,
    %c2_146 = arith.constant 2 : index
    %c0_147 = arith.constant 0 : index
    %c0_148 = arith.constant 0 : index
    %220 = vector.load %arg5[%c2_146, %c0_147, %c0_148] : memref<3x8x216xf32, #tpu.memory_space<vmem>>, vector<1x8x216xf32>
    %221 = vector.shape_cast %220 : vector<1x8x216xf32> to vector<8x216xf32>
    %c0_149 = arith.constant 0 : index
    %c0_150 = arith.constant 0 : index
    %222 = vector.load %arg10[%c0_149, %c0_150] : memref<216x256xf32, #tpu.memory_space<vmem>>, vector<216x256xf32>
    %cst_151 = arith.constant dense<0.000000e+00> : vector<8x256xf32>
    %223 = tpu.matmul %221, %222, %cst_151 {dimension_numbers = #tpu.dot_dimension_numbers<[1], [0], [0], [1], [0, 0, 1, 1], [], []>} : vector<8x216xf32>, vector<216x256xf32>, vector<8x256xf32> -> vector<8x256xf32>
    %c2_152 = arith.constant 2 : index
    %c0_153 = arith.constant 0 : index
    %c0_154 = arith.constant 0 : index
    %224 = vector.load %arg6[%c2_152, %c0_153, %c0_154] : memref<3x8x1xf32, #tpu.memory_space<vmem>>, vector<1x8x1xf32>
    %225 = vector.shape_cast %224 : vector<1x8x1xf32> to vector<8x1xf32>
    %226 = vector.broadcast %225 : vector<8x1xf32> to vector<8x256xf32>
    %227 = arith.addf %223, %226 : vector<8x256xf32>
    %cst_155 = arith.constant 0.000000e+00 : f32
    %228 = vector.broadcast %cst_155 : f32 to vector<8x256xf32>
    %229 = arith.cmpf ogt, %227, %228 : vector<8x256xf32>
    %cst_156 = arith.constant 2.000000e-01 : f32
    %230 = vector.broadcast %cst_156 : f32 to vector<8x256xf32>
    %231 = arith.mulf %230, %227 : vector<8x256xf32>
    %232 = arith.select %229, %227, %231 : vector<8x256xi1>, vector<8x256xf32>
    %cst_157 = arith.constant dense<0.000000e+00> : vector<8xf32>
    %233 = vector.multi_reduction <add>, %232, %cst_157 [1] : vector<8x256xf32> to vector<8xf32>
    %234 = vector.shape_cast %233 : vector<8xf32> to vector<8x1xf32>
    %cst_158 = arith.constant 2.560000e+02 : f32
    %235 = vector.broadcast %cst_158 : f32 to vector<8x1xf32>
    %236 = arith.divf %234, %235 : vector<8x1xf32>
    %237 = vector.broadcast %236 : vector<8x1xf32> to vector<8x256xf32>
    %238 = arith.subf %232, %237 : vector<8x256xf32>
    %239 = arith.mulf %238, %238 : vector<8x256xf32>
    %cst_159 = arith.constant dense<0.000000e+00> : vector<8xf32>
    %240 = vector.multi_reduction <add>, %239, %cst_159 [1] : vector<8x256xf32> to vector<8xf32>
    %241 = vector.shape_cast %240 : vector<8xf32> to vector<8x1xf32>
    %cst_160 = arith.constant 2.560000e+02 : f32
    %242 = vector.broadcast %cst_160 : f32 to vector<8x1xf32>
    %243 = arith.divf %241, %242 : vector<8x1xf32>
    %c2_161 = arith.constant 2 : index
    %c0_162 = arith.constant 0 : index
    %c0_163 = arith.constant 0 : index
    %244 = vector.load %arg7[%c2_161, %c0_162, %c0_163] : memref<3x8x1xf32, #tpu.memory_space<vmem>>, vector<1x8x1xf32>
    %245 = vector.shape_cast %244 : vector<1x8x1xf32> to vector<8x1xf32>
    %cst_164 = arith.constant 9.99999993E-9 : f32
    %246 = vector.broadcast %cst_164 : f32 to vector<8x1xf32>
    %247 = arith.addf %243, %246 : vector<8x1xf32>
    %248 = math.rsqrt %247 : vector<8x1xf32>
    %249 = arith.mulf %245, %248 : vector<8x1xf32>
    %250 = vector.broadcast %249 : vector<8x1xf32> to vector<8x256xf32>
    %251 = arith.mulf %238, %250 : vector<8x256xf32>
    %c2_165 = arith.constant 2 : index
    %c0_166 = arith.constant 0 : index
    %c0_167 = arith.constant 0 : index
    %252 = vector.load %arg8[%c2_165, %c0_166, %c0_167] : memref<3x8x1xf32, #tpu.memory_space<vmem>>, vector<1x8x1xf32>
    %253 = vector.shape_cast %252 : vector<1x8x1xf32> to vector<8x1xf32>
    %254 = vector.broadcast %253 : vector<8x1xf32> to vector<8x256xf32>
    %255 = arith.addf %251, %254 : vector<8x256xf32>
    %256 = arith.addf %178, %255 : vector<8x256xf32>
    %c0_168 = arith.constant 0 : index
    %c24_169 = arith.constant 24 : index
    %c0_170 = arith.constant 0 : index
    %257 = vector.load %arg9[%c0_168, %c24_169, %c0_170] : memref<1x32x256xf32, #tpu.memory_space<vmem>>, vector<1x8x256xf32>
    %258 = vector.shape_cast %257 : vector<1x8x256xf32> to vector<8x256xf32>
    %259 = vector.shape_cast %256 : vector<8x256xf32> to vector<1x8x256xf32>
    tpu.vector_store %arg9[%c0_168, %c24_169, %c0_170], %259 {strides = array<i32>} : memref<1x32x256xf32, #tpu.memory_space<vmem>>, vector<1x8x256xf32>,
    return
  }
  func.func @transform_0(%arg0: i32) -> (i32, i32, i32) {
    %c0_i32 = arith.constant 0 : i32
    %c0_i32_0 = arith.constant 0 : i32
    %c0_i32_1 = arith.constant 0 : i32
    return %arg0, %c0_i32, %c0_i32_0 : i32, i32, i32
  }
  func.func @transform_1(%arg0: i32) -> (i32, i32) {
    %c0_i32 = arith.constant 0 : i32
    %c0_i32_0 = arith.constant 0 : i32
    %c0_i32_1 = arith.constant 0 : i32
    return %c0_i32, %c0_i32_0 : i32, i32
  }
  func.func @transform_2(%arg0: i32) -> (i32, i32) {
    %c0_i32 = arith.constant 0 : i32
    %c0_i32_0 = arith.constant 0 : i32
    %c0_i32_1 = arith.constant 0 : i32
    return %c0_i32, %c0_i32_0 : i32, i32
  }
  func.func @transform_3(%arg0: i32) -> (i32, i32) {
    %c0_i32 = arith.constant 0 : i32
    %c0_i32_0 = arith.constant 0 : i32
    %c0_i32_1 = arith.constant 0 : i32
    return %c0_i32, %c0_i32_0 : i32, i32
  }
  func.func @transform_4(%arg0: i32) -> (i32, i32, i32) {
    %c0_i32 = arith.constant 0 : i32
    %c0_i32_0 = arith.constant 0 : i32
    %c0_i32_1 = arith.constant 0 : i32
    %c0_i32_2 = arith.constant 0 : i32
    return %c0_i32, %c0_i32_0, %c0_i32_1 : i32, i32, i32
  }
  func.func @transform_5(%arg0: i32) -> (i32, i32, i32) {
    %c0_i32 = arith.constant 0 : i32
    %c0_i32_0 = arith.constant 0 : i32
    %c0_i32_1 = arith.constant 0 : i32
    %c0_i32_2 = arith.constant 0 : i32
    return %c0_i32, %c0_i32_0, %c0_i32_1 : i32, i32, i32
  }
  func.func @transform_6(%arg0: i32) -> (i32, i32, i32) {
    %c0_i32 = arith.constant 0 : i32
    %c0_i32_0 = arith.constant 0 : i32
    %c0_i32_1 = arith.constant 0 : i32
    %c0_i32_2 = arith.constant 0 : i32
    return %c0_i32, %c0_i32_0, %c0_i32_1 : i32, i32, i32
  }
  func.func @transform_7(%arg0: i32) -> (i32, i32, i32) {
    %c0_i32 = arith.constant 0 : i32
    %c0_i32_0 = arith.constant 0 : i32
    %c0_i32_1 = arith.constant 0 : i32
    %c0_i32_2 = arith.constant 0 : i32
    return %c0_i32, %c0_i32_0, %c0_i32_1 : i32, i32, i32
  }
  func.func @transform_8(%arg0: i32) -> (i32, i32, i32) {
    %c0_i32 = arith.constant 0 : i32
    %c0_i32_0 = arith.constant 0 : i32
    %c0_i32_1 = arith.constant 0 : i32
    return %arg0, %c0_i32, %c0_i32_0 : i32, i32, i32
  }
}

</mosaic_0001>

<llo_original>
// kernel: dense_block_encoder_forward.1
$region0: #{dense_block_encoder_forward.1}
  #allocation0 [shape = 'u32[]', space=smem, size = 0x4, offset = 0x4, fixed_abs, tag = 'smem constant byte address 0x4 - core index']
  #allocation1 [shape = 'u32[144,128]{1,0:T(1,128)}', space=vmem, size = 0x12000, scoped, tag = 'internal scratch']
  #allocation2 [shape = 'f32[216,256]{1,0:T(8,128)}', space=vmem, size = 0x36000, scoped, tag = 'scratch operand']
  %s0 = inlined_call_operand.vmem [shape: f32[2,8,256], index: 0, kind: input, shape index: {}]
  %s1 = inlined_call_operand.vmem [shape: f32[9,256], index: 1, kind: input, shape index: {}]
  %s2 = inlined_call_operand.vmem [shape: f32[8,8], index: 2, kind: input, shape index: {}]
  %s3 = inlined_call_operand.vmem [shape: f32[8,1], index: 3, kind: input, shape index: {}]
  %s4 = inlined_call_operand.vmem [shape: f32[3,8,216], index: 4, kind: input, shape index: {}]
  %s5 = inlined_call_operand.vmem [shape: f32[3,8,1], index: 5, kind: input, shape index: {}]
  %s6 = inlined_call_operand.vmem [shape: f32[3,8,1], index: 6, kind: input, shape index: {}]
  %s7 = inlined_call_operand.vmem [shape: f32[3,8,1], index: 7, kind: input, shape index: {}]
  %s8 = inlined_call_operand.vmem [shape: f32[2,32,256], index: 8, kind: output, shape index: {}]
  %s9 = sld [smem:[#allocation0]]
  $region65: #{dense_block_encoder_forward.1} parent=0
    _
  %s11 = ssub.s32 1, %s9
  %s12 = scalar_select 0, %s11, %s9
  loop: start=0, step=1, limit=4
  $region2: #{dense_block_encoder_forward.1} parent=0 // loop_pre_header
    _
  $region3: #{dense_block_encoder_forward.1} parent=0 // loop_header
    %s14 = sphi 0, %s18
    %p15 = scmp.ge.s32.totalorder %s14, 4
    %s24 = sphi 0, %s26
    %s27 = sphi 0, %s24
    %s28 = sphi 0, %s27
    %s44 = sphi 0, %s28
    %s48 = sphi 0, %s48
    %s50 = sphi 0, %s48
    %s51 = sphi 0, %s50
    %s65 = sphi 0, %s51
    %s69 = sphi 0, %s69
    %s71 = sphi 0, %s69
    %s72 = sphi 0, %s71
    %s86 = sphi 0, %s72
    %s90 = sphi 0, %s90
    %s92 = sphi 0, %s90
    %s93 = sphi 0, %s92
    %s107 = sphi 0, %s93
    %s111 = sphi 0, %s111
    %s113 = sphi 0, %s111
    %s114 = sphi 0, %s113
    %s128 = sphi 0, %s114
    %s132 = sphi 0, %s132
    %s134 = sphi 0, %s132
    %s135 = sphi 0, %s134
    %s149 = sphi 0, %s135
    %s153 = sphi 0, %s153
    %s155 = sphi 0, %s153
    %s156 = sphi 0, %s155
    %s170 = sphi 0, %s156
    %s174 = sphi 0, %s174
    %s176 = sphi 0, %s174
    %s177 = sphi 0, %s176
    %s191 = sphi 0, %s177
    %s197 = sphi 0, %s199
    %s200 = sphi 0, %s197
    %s201 = sphi 0, %s200
    %s217 = sphi 0, %s201
  $region4: #{dense_block_encoder_forward.1} parent=0 // loop_header_branch
    %17 = sbr.rel (%p15) target = $region8
  $region5: #{dense_block_encoder_forward.1} parent=0 // loop_body
    %s19 = ssub.s32 %s14, 1
    %s20 = ssub.s32 %s14, 2
    %s21 = sadd.s32 %s14, 1
    %s22 = ssub.s32 %s14, %s21
    %p23 = scmp.eq.s32.totalorder %s22, 0
    %s25 = sadd.s32 %s24, 1
    %s26 = scalar_select %p23, %s24, %s25
    %p29 = pneg %p23
    %p30 = scmp.eq.s32.totalorder %s14, 1
    %p31 = por %p29, %p30
    %p32 = scmp.ne.s32.totalorder %s24, %s27
    %p33 = scmp.eq.s32.totalorder %s14, 0
    %p34 = por %p32, %p33
    %p35 = scmp.ne.s32.totalorder %s24, %s27
    %p36 = scmp.eq.s32.totalorder %s19, 1
    %p37 = por %p35, %p36
    %p38 = scmp.ne.s32.totalorder %s27, %s28
    %p39 = scmp.eq.s32.totalorder %s19, 0
    %p40 = por %p38, %p39
    %p41 = scmp.ne.s32.totalorder %s27, %s28
    %p42 = scmp.eq.s32.totalorder %s20, 1
    %p43 = por %p41, %p42
    %p45 = scmp.ne.s32.totalorder %s28, %s44
    %p46 = scmp.eq.s32.totalorder %s20, 0
    %p47 = por %p45, %p46
    %s49 = sadd.s32 %s48, 1
    %p52 = scmp.eq.s32.totalorder %s14, 1
    %p53 = scmp.ne.s32.totalorder %s48, %s50
    %p54 = scmp.eq.s32.totalorder %s14, 0
    %p55 = por %p53, %p54
    %p56 = scmp.ne.s32.totalorder %s48, %s50
    %p57 = scmp.eq.s32.totalorder %s19, 1
    %p58 = por %p56, %p57
    %p59 = scmp.ne.s32.totalorder %s50, %s51
    %p60 = scmp.eq.s32.totalorder %s19, 0
    %p61 = por %p59, %p60
    %p62 = scmp.ne.s32.totalorder %s50, %s51
    %p63 = scmp.eq.s32.totalorder %s20, 1
    %p64 = por %p62, %p63
    %p66 = scmp.ne.s32.totalorder %s51, %s65
    %p67 = scmp.eq.s32.totalorder %s20, 0
    %p68 = por %p66, %p67
    %s70 = sadd.s32 %s69, 1
    %p73 = scmp.eq.s32.totalorder %s14, 1
    %p74 = scmp.ne.s32.totalorder %s69, %s71
    %p75 = scmp.eq.s32.totalorder %s14, 0
    %p76 = por %p74, %p75
    %p77 = scmp.ne.s32.totalorder %s69, %s71
    %p78 = scmp.eq.s32.totalorder %s19, 1
    %p79 = por %p77, %p78
    %p80 = scmp.ne.s32.totalorder %s71, %s72
    %p81 = scmp.eq.s32.totalorder %s19, 0
    %p82 = por %p80, %p81
    %p83 = scmp.ne.s32.totalorder %s71, %s72
    %p84 = scmp.eq.s32.totalorder %s20, 1
    %p85 = por %p83, %p84
    %p87 = scmp.ne.s32.totalorder %s72, %s86
    %p88 = scmp.eq.s32.totalorder %s20, 0
    %p89 = por %p87, %p88
    %s91 = sadd.s32 %s90, 1
    %p94 = scmp.eq.s32.totalorder %s14, 1
    %p95 = scmp.ne.s32.totalorder %s90, %s92
    %p96 = scmp.eq.s32.totalorder %s14, 0
    %p97 = por %p95, %p96
    %p98 = scmp.ne.s32.totalorder %s90, %s92
    %p99 = scmp.eq.s32.totalorder %s19, 1
    %p100 = por %p98, %p99
    %p101 = scmp.ne.s32.totalorder %s92, %s93
    %p102 = scmp.eq.s32.totalorder %s19, 0
    %p103 = por %p101, %p102
    %p104 = scmp.ne.s32.totalorder %s92, %s93
    %p105 = scmp.eq.s32.totalorder %s20, 1
    %p106 = por %p104, %p105
    %p108 = scmp.ne.s32.totalorder %s93, %s107
    %p109 = scmp.eq.s32.totalorder %s20, 0
    %p110 = por %p108, %p109
    %s112 = sadd.s32 %s111, 1
    %p115 = scmp.eq.s32.totalorder %s14, 1
    %p116 = scmp.ne.s32.totalorder %s111, %s113
    %p117 = scmp.eq.s32.totalorder %s14, 0
    %p118 = por %p116, %p117
    %p119 = scmp.ne.s32.totalorder %s111, %s113
    %p120 = scmp.eq.s32.totalorder %s19, 1
    %p121 = por %p119, %p120
    %p122 = scmp.ne.s32.totalorder %s113, %s114
    %p123 = scmp.eq.s32.totalorder %s19, 0
    %p124 = por %p122, %p123
    %p125 = scmp.ne.s32.totalorder %s113, %s114
    %p126 = scmp.eq.s32.totalorder %s20, 1
    %p127 = por %p125, %p126
    %p129 = scmp.ne.s32.totalorder %s114, %s128
    %p130 = scmp.eq.s32.totalorder %s20, 0
    %p131 = por %p129, %p130
    %s133 = sadd.s32 %s132, 1
    %p136 = scmp.eq.s32.totalorder %s14, 1
    %p137 = scmp.ne.s32.totalorder %s132, %s134
    %p138 = scmp.eq.s32.totalorder %s14, 0
    %p139 = por %p137, %p138
    %p140 = scmp.ne.s32.totalorder %s132, %s134
    %p141 = scmp.eq.s32.totalorder %s19, 1
    %p142 = por %p140, %p141
    %p143 = scmp.ne.s32.totalorder %s134, %s135
    %p144 = scmp.eq.s32.totalorder %s19, 0
    %p145 = por %p143, %p144
    %p146 = scmp.ne.s32.totalorder %s134, %s135
    %p147 = scmp.eq.s32.totalorder %s20, 1
    %p148 = por %p146, %p147
    %p150 = scmp.ne.s32.totalorder %s135, %s149
    %p151 = scmp.eq.s32.totalorder %s20, 0
    %p152 = por %p150, %p151
    %s154 = sadd.s32 %s153, 1
    %p157 = scmp.eq.s32.totalorder %s14, 1
    %p158 = scmp.ne.s32.totalorder %s153, %s155
    %p159 = scmp.eq.s32.totalorder %s14, 0
    %p160 = por %p158, %p159
    %p161 = scmp.ne.s32.totalorder %s153, %s155
    %p162 = scmp.eq.s32.totalorder %s19, 1
    %p163 = por %p161, %p162
    %p164 = scmp.ne.s32.totalorder %s155, %s156
    %p165 = scmp.eq.s32.totalorder %s19, 0
    %p166 = por %p164, %p165
    %p167 = scmp.ne.s32.totalorder %s155, %s156
    %p168 = scmp.eq.s32.totalorder %s20, 1
    %p169 = por %p167, %p168
    %p171 = scmp.ne.s32.totalorder %s156, %s170
    %p172 = scmp.eq.s32.totalorder %s20, 0
    %p173 = por %p171, %p172
    %s175 = sadd.s32 %s174, 1
    %p178 = scmp.eq.s32.totalorder %s14, 1
    %p179 = scmp.ne.s32.totalorder %s174, %s176
    %p180 = scmp.eq.s32.totalorder %s14, 0
    %p181 = por %p179, %p180
    %p182 = scmp.ne.s32.totalorder %s174, %s176
    %p183 = scmp.eq.s32.totalorder %s19, 1
    %p184 = por %p182, %p183
    %p185 = scmp.ne.s32.totalorder %s176, %s177
    %p186 = scmp.eq.s32.totalorder %s19, 0
    %p187 = por %p185, %p186
    %p188 = scmp.ne.s32.totalorder %s176, %s177
    %p189 = scmp.eq.s32.totalorder %s20, 1
    %p190 = por %p188, %p189
    %p192 = scmp.ne.s32.totalorder %s177, %s191
    %p193 = scmp.eq.s32.totalorder %s20, 0
    %p194 = por %p192, %p193
    %s195 = ssub.s32 %s14, %s21
    %p196 = scmp.eq.s32.totalorder %s195, 0
    %s198 = sadd.s32 %s197, 1
    %s199 = scalar_select %p196, %s197, %s198
    %p202 = pneg %p196
    %p203 = scmp.eq.s32.totalorder %s14, 1
    %p204 = por %p202, %p203
    %p205 = scmp.ne.s32.totalorder %s197, %s200
    %p206 = scmp.eq.s32.totalorder %s14, 0
    %p207 = por %p205, %p206
    %p208 = scmp.ne.s32.totalorder %s197, %s200
    %p209 = scmp.eq.s32.totalorder %s19, 1
    %p210 = por %p208, %p209
    %p211 = scmp.ne.s32.totalorder %s200, %s201
    %p212 = scmp.eq.s32.totalorder %s19, 0
    %p213 = por %p211, %p212
    %p214 = scmp.ne.s32.totalorder %s200, %s201
    %p215 = scmp.eq.s32.totalorder %s20, 1
    %p216 = por %p214, %p215
    %p218 = scmp.ne.s32.totalorder %s201, %s217
    %p219 = scmp.eq.s32.totalorder %s20, 0
    %p220 = por %p218, %p219
    %p221 = scmp.le.s32.totalorder 1, %s14
    %p222 = scmp.lt.s32.totalorder %s14, 3
    %p223 = pnand %p221, %p222
    %p224 = pneg %p223
    // Predicated region
    $region9: #{dense_block_encoder_forward.1} parent=5 // pred_check
      _
    $region10: #{dense_block_encoder_forward.1} parent=5 // pred_check_branch
      %226 = sbr.rel (%p223) target = $region12
    $region11: #{dense_block_encoder_forward.1} parent=5 // pred_region
      %s227 = ssub.s32 %s14, 1
      // Predicated region
      $region13: #{dense_block_encoder_forward.1} parent=11 // pred_check
        %p228 = pneg %p61
      $region14: #{dense_block_encoder_forward.1} parent=11 // pred_check_branch
        %230 = sbr.rel (%p228) target = $region16
      $region15: #{dense_block_encoder_forward.1} parent=11 // pred_region
        _
      $region16: #{dense_block_encoder_forward.1} parent=11 // pred_fallthru
        _
      // Predicated region
      $region17: #{dense_block_encoder_forward.1} parent=11 // pred_check
        %p231 = pneg %p82
      $region18: #{dense_block_encoder_forward.1} parent=11 // pred_check_branch
        %233 = sbr.rel (%p231) target = $region20
      $region19: #{dense_block_encoder_forward.1} parent=11 // pred_region
        _
      $region20: #{dense_block_encoder_forward.1} parent=11 // pred_fallthru
        _
      // Predicated region
      $region21: #{dense_block_encoder_forward.1} parent=11 // pred_check
        %p234 = pneg %p103
      $region22: #{dense_block_encoder_forward.1} parent=11 // pred_check_branch
        %236 = sbr.rel (%p234) target = $region24
      $region23: #{dense_block_encoder_forward.1} parent=11 // pred_region
        _
      $region24: #{dense_block_encoder_forward.1} parent=11 // pred_fallthru
        _
      // Predicated region
      $region25: #{dense_block_encoder_forward.1} parent=11 // pred_check
        %p237 = pneg %p124
      $region26: #{dense_block_encoder_forward.1} parent=11 // pred_check_branch
        %239 = sbr.rel (%p237) target = $region28
      $region27: #{dense_block_encoder_forward.1} parent=11 // pred_region
        _
      $region28: #{dense_block_encoder_forward.1} parent=11 // pred_fallthru
        _
      // Predicated region
      $region29: #{dense_block_encoder_forward.1} parent=11 // pred_check
        %p240 = pneg %p145
      $region30: #{dense_block_encoder_forward.1} parent=11 // pred_check_branch
        %242 = sbr.rel (%p240) target = $region32
      $region31: #{dense_block_encoder_forward.1} parent=11 // pred_region
        _
      $region32: #{dense_block_encoder_forward.1} parent=11 // pred_fallthru
        _
      // Predicated region
      $region33: #{dense_block_encoder_forward.1} parent=11 // pred_check
        %p243 = pneg %p166
      $region34: #{dense_block_encoder_forward.1} parent=11 // pred_check_branch
        %245 = sbr.rel (%p243) target = $region36
      $region35: #{dense_block_encoder_forward.1} parent=11 // pred_region
        _
      $region36: #{dense_block_encoder_forward.1} parent=11 // pred_fallthru
        _
      // Predicated region
      $region37: #{dense_block_encoder_forward.1} parent=11 // pred_check
        %p246 = pneg %p187
      $region38: #{dense_block_encoder_forward.1} parent=11 // pred_check_branch
        %248 = sbr.rel (%p246) target = $region40
      $region39: #{dense_block_encoder_forward.1} parent=11 // pred_region
        _
      $region40: #{dense_block_encoder_forward.1} parent=11 // pred_fallthru
        _
    $region12: #{dense_block_encoder_forward.1} parent=5 // pred_fallthru
      _
    %p249 = scmp.lt.s32.totalorder %s14, 2
    // Predicated region
    $region41: #{dense_block_encoder_forward.1} parent=5 // pred_check
      %p250 = pneg %p249
    $region42: #{dense_block_encoder_forward.1} parent=5 // pred_check_branch
      %252 = sbr.rel (%p250) target = $region44
    $region43: #{dense_block_encoder_forward.1} parent=5 // pred_region
      // Predicated region
      $region45: #{dense_block_encoder_forward.1} parent=43 // pred_check
        %p253 = pneg %p34
      $region46: #{dense_block_encoder_forward.1} parent=43 // pred_check_branch
        %255 = sbr.rel (%p253) target = $region48
      $region47: #{dense_block_encoder_forward.1} parent=43 // pred_region
        %p256 = scmp.lt.s32.totalorder %s14, 1
        %s257 = scalar_select %p256, %s14, 1
        %s258 = smul.addr %s257, 2
        %s259 = smul.addr %s258, 8
        %s260 = scalar_lea.vmem %s0, %s259
      $region48: #{dense_block_encoder_forward.1} parent=43 // pred_fallthru
        _
    $region44: #{dense_block_encoder_forward.1} parent=5 // pred_fallthru
      _
    %p261 = scmp.le.s32.totalorder 1, %s14
    %p262 = scmp.lt.s32.totalorder %s14, 3
    %p263 = pnand %p261, %p262
    %p264 = pneg %p263
    // Predicated region
    $region49: #{dense_block_encoder_forward.1} parent=5 // pred_check
      _
    $region50: #{dense_block_encoder_forward.1} parent=5 // pred_check_branch
      %266 = sbr.rel (%p263) target = $region52
    $region51: #{dense_block_encoder_forward.1} parent=5 // pred_region
      %s267 = ssub.s32 %s14, 1
      %p268 = scmp.lt.s32.totalorder %s19, 1
      %s269 = scalar_select %p268, %s19, 1
      %s270 = smul.addr %s269, 2
      %s271 = smul.addr %s270, 8
      %s272 = scalar_lea.vmem %s0, %s271
      %p273 = pneg %p40
      %p274 = pneg %p37
      %p275 = pneg %p61
      %p276 = pneg %p58
      %p277 = pneg %p82
      %p278 = pneg %p79
      %p279 = pneg %p103
      %p280 = pneg %p100
      %p281 = pneg %p124
      %p282 = pneg %p121
      %p283 = pneg %p145
      %p284 = pneg %p142
      %p285 = pneg %p166
      %p286 = pneg %p163
      %p287 = pneg %p187
      %p288 = pneg %p184
      %p289 = pneg %p213
      %p290 = pneg %p210
      %p291 = scmp.lt.s32.totalorder %s19, 1
      %s292 = scalar_select %p291, %s19, 1
      %s293 = smul.addr %s292, 8
      %s294 = smul.addr %s293, 8
      %s295 = scalar_lea.vmem %s8, %s294
      %p296 = scmp.lt.s32.totalorder %s19, 1
      %s297 = scalar_select %p296, %s19, 1
      %s298 = smul.addr %s297, 2
      %s299 = smul.addr %s298, 8
      %s300 = scalar_lea.vmem %s0, %s299
      %p301 = scmp.lt.s32.totalorder %s19, 1
      %s302 = scalar_select %p301, %s19, 1
      %s303 = smul.addr %s302, 8
      %s304 = smul.addr %s303, 8
      %s305 = scalar_lea.vmem %s8, %s304
      %v306 = vld [vmem:[%s300] sm:$0xff]
      %v307 = vld [vmem:[%s300 + $0x8] sm:$0xff]
      %308 = vst [vmem:[%s305] sm:$0xff] %v306
      %309 = vst [vmem:[%s305 + $0x8] sm:$0xff] %v307
      %v310 = vld [vmem:[%s2] sm:$0xff]
      %v311 = vld [vmem:[%s3] sm:$0xff]
      %313 = vset.pattern.permute.xlu0 0
      %314 = vperm.xlu0 %313, %v311
      %v315 = vpop.permute.xlu0 %314
      %vm317 = vcmask 64512
      %v319 = vsel %vm317, %v310, 0
      %321 = vmatprep.subr.mxu0 0.0
      %322 = vmatpush1.msra.mxu0 0.0
      %323 = vmatprep.subr.mxu0 0.0
      %324 = vmatpush1.msra.mxu0 0.0
      %325 = vmatprep.subr.mxu0 0.0
      %326 = vmatpush1.msra.mxu0 0.0
      %327 = vmatprep.subr.mxu0 0.0
      %328 = vmatpush1.msra.mxu0 0.0
      %329 = vmatprep.subr.mxu0 0.0
      %330 = vmatpush1.msra.mxu0 0.0
      %331 = vmatprep.subr.mxu0 0.0
      %332 = vmatpush1.msra.mxu0 0.0
      %333 = vmatprep.subr.mxu0 0.0
      %334 = vmatpush1.msra.mxu0 0.0
      %335 = vmatprep.subr.mxu0 0.0
      %336 = vmatpush1.msra.mxu0 0.0
      %337 = vmatprep.subr.mxu0 0.0
      %338 = vmatpush1.msra.mxu0 0.0
      %339 = vmatprep.subr.mxu0 0.0
      %340 = vmatpush1.msra.mxu0 0.0
      %341 = vmatprep.subr.mxu0 0.0
      %342 = vmatpush1.msra.mxu0 0.0
      %343 = vmatprep.subr.mxu0 0.0
      %344 = vmatpush1.msra.mxu0 0.0
      %345 = vmatprep.subr.mxu0 0.0
      %346 = vmatpush1.msra.mxu0 0.0
      %347 = vmatprep.subr.mxu0 0.0
      %348 = vmatpush1.msra.mxu0 0.0
      %349 = vmatprep.subr.mxu0 0.0
      %350 = vmatpush1.msra.mxu0 0.0
      %351 = vmatprep.subr.mxu0 %v307
      %352 = vmatpush1.msra.mxu0 %v306
      %353 = vmatprep.subr.mxu0 0.0
      %354 = vmatpush2.msra.mxu0 0.0
      %355 = vmatprep.subr.mxu0 0.0
      %356 = vmatpush2.msra.mxu0 0.0
      %357 = vmatprep.subr.mxu0 0.0
      %358 = vmatpush2.msra.mxu0 0.0
      %359 = vmatprep.subr.mxu0 0.0
      %360 = vmatpush2.msra.mxu0 0.0
      %361 = vmatprep.subr.mxu0 0.0
      %362 = vmatpush2.msra.mxu0 0.0
      %363 = vmatprep.subr.mxu0 0.0
      %364 = vmatpush2.msra.mxu0 0.0
      %365 = vmatprep.subr.mxu0 0.0
      %366 = vmatpush2.msra.mxu0 0.0
      %367 = vmatprep.subr.mxu0 0.0
      %368 = vmatpush2.msra.mxu0 0.0
      %369 = vmatprep.subr.mxu0 0.0
      %370 = vmatpush2.msra.mxu0 0.0
      %371 = vmatprep.subr.mxu0 0.0
      %372 = vmatpush2.msra.mxu0 0.0
      %373 = vmatprep.subr.mxu0 0.0
      %374 = vmatpush2.msra.mxu0 0.0
      %375 = vmatprep.subr.mxu0 0.0
      %376 = vmatpush2.msra.mxu0 0.0
      %377 = vmatprep.subr.mxu0 0.0
      %378 = vmatpush2.msra.mxu0 0.0
      %379 = vmatprep.subr.mxu0 0.0
      %380 = vmatpush2.msra.mxu0 0.0
      %381 = vmatprep.subr.mxu0 0.0
      %382 = vmatpush2.msra.mxu0 0.0
      %383 = vmatprep.subr.mxu0 0.0
      %384 = vmatpush2.msra.mxu0 0.0
      %385 = vmatprep.mubr.f32.mxu0 0.0
      %386 = vmatmul.mubr.f32.gmra.mxu0 %v319
      %v387 = vpop.f32.mrf.mxu0
      %v388 = vadd.f32 %v315, %v387
      %v389 = vpop.f32.mrf.mxu0
      %v390 = vadd.f32 %v315, %v389
      %391 = vdwg.mxu0
      %392 = vrot.lane.b32.xlu0 %v306, 17
      %v393 = vpop.permute.xlu0 %392
      %394 = vrot.lane.b32.xlu0 %v307, 17
      %v395 = vpop.permute.xlu0 %394
      %v396 = vlaneseq
      %v397 = vand.u32 %v396, 127
      %vm398 = vcmp.lt.s32.totalorder %v397, 17
      %v399 = vsel %vm398, %v393, %v395
      %v400 = vsel %vm398, %v395, %v393
      %v401 = vld [vmem:[%s1] ss:$8 sm:$0x3]
      %v403 = vlaneseq
      %v404 = vshrl.u32 %v403, 7
      %v405 = vsub.s32 0, %v404
      %v406 = vrot.slane %v401, %v405
      %v407 = vlaneseq
      %v408 = vshrl.u32 %v407, 7
      %v409 = vsub.s32 1, %v408
      %v410 = vrot.slane %v401, %v409
      %v413 = vmul.f32 %v400, %v406
      %v414 = vmul.f32 %v399, %v410
      %415 = vst [vmem:[#allocation2] sm:$0xff] %v413
      %416 = vst [vmem:[#allocation2 + $0x8] sm:$0xff] %v414
      %417 = vrot.lane.b32.xlu0 %v306, 16
      %v418 = vpop.permute.xlu0 %417
      %419 = vrot.lane.b32.xlu0 %v307, 16
      %v420 = vpop.permute.xlu0 %419
      %vm421 = vcmp.lt.s32.totalorder %v397, 16
      %v422 = vsel %vm421, %v418, %v420
      %v423 = vsel %vm421, %v420, %v418
      %s424 = scalar_lea.vmem %s1, 1
      %v425 = vld [vmem:[%s424] ss:$8 sm:$0x3]
      %v427 = vlaneseq
      %v428 = vshrl.u32 %v427, 7
      %v429 = vsub.s32 0, %v428
      %v430 = vrot.slane %v425, %v429
      %v431 = vlaneseq
      %v432 = vshrl.u32 %v431, 7
      %v433 = vsub.s32 1, %v432
      %v434 = vrot.slane %v425, %v433
      %v437 = vmul.f32 %v423, %v430
      %v438 = vmul.f32 %v422, %v434
      %439 = vst [vmem:[#allocation2 + $0x10] sm:$0xff] %v437
      %440 = vst [vmem:[#allocation2 + $0x18] sm:$0xff] %v438
      %441 = vrot.lane.b32.xlu0 %v306, 15
      %v442 = vpop.permute.xlu0 %441
      %443 = vrot.lane.b32.xlu0 %v307, 15
      %v444 = vpop.permute.xlu0 %443
      %vm445 = vcmp.lt.s32.totalorder %v397, 15
      %v446 = vsel %vm445, %v442, %v444
      %v447 = vsel %vm445, %v444, %v442
      %s448 = scalar_lea.vmem %s1, 2
      %v449 = vld [vmem:[%s448] ss:$8 sm:$0x3]
      %v451 = vlaneseq
      %v452 = vshrl.u32 %v451, 7
      %v453 = vsub.s32 0, %v452
      %v454 = vrot.slane %v449, %v453
      %v455 = vlaneseq
      %v456 = vshrl.u32 %v455, 7
      %v457 = vsub.s32 1, %v456
      %v458 = vrot.slane %v449, %v457
      %v461 = vmul.f32 %v447, %v454
      %v462 = vmul.f32 %v446, %v458
      %463 = vst [vmem:[#allocation2 + $0x20] sm:$0xff] %v461
      %464 = vst [vmem:[#allocation2 + $0x28] sm:$0xff] %v462
      %465 = vrot.lane.b32.xlu0 %v306, 1
      %v466 = vpop.permute.xlu0 %465
      %467 = vrot.lane.b32.xlu0 %v307, 1
      %v468 = vpop.permute.xlu0 %467
      %vm469 = vcmp.lt.s32.totalorder %v397, 1
      %v470 = vsel %vm469, %v466, %v468
      %v471 = vsel %vm469, %v468, %v466
      %s472 = scalar_lea.vmem %s1, 3
      %v473 = vld [vmem:[%s472] ss:$8 sm:$0x3]
      %v475 = vlaneseq
      %v476 = vshrl.u32 %v475, 7
      %v477 = vsub.s32 0, %v476
      %v478 = vrot.slane %v473, %v477
      %v479 = vlaneseq
      %v480 = vshrl.u32 %v479, 7
      %v481 = vsub.s32 1, %v480
      %v482 = vrot.slane %v473, %v481
      %v485 = vmul.f32 %v471, %v478
      %v486 = vmul.f32 %v470, %v482
      %487 = vst [vmem:[#allocation2 + $0x30] sm:$0xff] %v485
      %488 = vst [vmem:[#allocation2 + $0x38] sm:$0xff] %v486
      %489 = vst [vmem:[#allocation2 + $0x40] sm:$0xff] %v306
      %490 = vst [vmem:[#allocation2 + $0x48] sm:$0xff] %v307
      %491 = vrot.lane.b32.xlu0 %v306, 127
      %v492 = vpop.permute.xlu0 %491
      %493 = vrot.lane.b32.xlu0 %v307, 127
      %v494 = vpop.permute.xlu0 %493
      %vm495 = vcmp.lt.s32.totalorder %v397, 127
      %v496 = vsel %vm495, %v492, %v494
      %v497 = vsel %vm495, %v494, %v492
      %s498 = scalar_lea.vmem %s1, 5
      %v499 = vld [vmem:[%s498] ss:$8 sm:$0x3]
      %v501 = vlaneseq
      %v502 = vshrl.u32 %v501, 7
      %v503 = vsub.s32 0, %v502
      %v504 = vrot.slane %v499, %v503
      %v505 = vlaneseq
      %v506 = vshrl.u32 %v505, 7
      %v507 = vsub.s32 1, %v506
      %v508 = vrot.slane %v499, %v507
      %v511 = vmul.f32 %v496, %v504
      %v512 = vmul.f32 %v497, %v508
      %513 = vst [vmem:[#allocation2 + $0x50] sm:$0xff] %v511
      %514 = vst [vmem:[#allocation2 + $0x58] sm:$0xff] %v512
      %515 = vrot.lane.b32.xlu0 %v306, 113
      %v516 = vpop.permute.xlu0 %515
      %517 = vrot.lane.b32.xlu0 %v307, 113
      %v518 = vpop.permute.xlu0 %517
      %vm519 = vcmp.lt.s32.totalorder %v397, 113
      %v520 = vsel %vm519, %v516, %v518
      %v521 = vsel %vm519, %v518, %v516
      %s522 = scalar_lea.vmem %s1, 6
      %v523 = vld [vmem:[%s522] ss:$8 sm:$0x3]
      %v525 = vlaneseq
      %v526 = vshrl.u32 %v525, 7
      %v527 = vsub.s32 0, %v526
      %v528 = vrot.slane %v523, %v527
      %v529 = vlaneseq
      %v530 = vshrl.u32 %v529, 7
      %v531 = vsub.s32 1, %v530
      %v532 = vrot.slane %v523, %v531
      %v535 = vmul.f32 %v520, %v528
      %v536 = vmul.f32 %v521, %v532
      %537 = vst [vmem:[#allocation2 + $0x60] sm:$0xff] %v535
      %538 = vst [vmem:[#allocation2 + $0x68] sm:$0xff] %v536
      %539 = vrot.lane.b32.xlu0 %v306, 112
      %v540 = vpop.permute.xlu0 %539
      %541 = vrot.lane.b32.xlu0 %v307, 112
      %v542 = vpop.permute.xlu0 %541
      %vm543 = vcmp.lt.s32.totalorder %v397, 112
      %v544 = vsel %vm543, %v540, %v542
      %v545 = vsel %vm543, %v542, %v540
      %s546 = scalar_lea.vmem %s1, 7
      %v547 = vld [vmem:[%s546] ss:$8 sm:$0x3]
      %v549 = vlaneseq
      %v550 = vshrl.u32 %v549, 7
      %v551 = vsub.s32 0, %v550
      %v552 = vrot.slane %v547, %v551
      %v553 = vlaneseq
      %v554 = vshrl.u32 %v553, 7
      %v555 = vsub.s32 1, %v554
      %v556 = vrot.slane %v547, %v555
      %v559 = vmul.f32 %v544, %v552
      %v560 = vmul.f32 %v545, %v556
      %561 = vst [vmem:[#allocation2 + $0x70] sm:$0xff] %v559
      %562 = vst [vmem:[#allocation2 + $0x78] sm:$0xff] %v560
      %563 = vrot.lane.b32.xlu0 %v306, 111
      %v564 = vpop.permute.xlu0 %563
      %565 = vrot.lane.b32.xlu0 %v307, 111
      %v566 = vpop.permute.xlu0 %565
      %vm567 = vcmp.lt.s32.totalorder %v397, 111
      %v568 = vsel %vm567, %v564, %v566
      %v569 = vsel %vm567, %v566, %v564
      %s570 = scalar_lea.vmem %s1, 16
      %v571 = vld [vmem:[%s570] ss:$8 sm:$0x3]
      %v573 = vlaneseq
      %v574 = vshrl.u32 %v573, 7
      %v575 = vsub.s32 0, %v574
      %v576 = vrot.slane %v571, %v575
      %v577 = vlaneseq
      %v578 = vshrl.u32 %v577, 7
      %v579 = vsub.s32 1, %v578
      %v580 = vrot.slane %v571, %v579
      %v583 = vmul.f32 %v568, %v576
      %v584 = vmul.f32 %v569, %v580
      %585 = vst [vmem:[#allocation2 + $0x80] sm:$0xff] %v583
      %586 = vst [vmem:[#allocation2 + $0x88] sm:$0xff] %v584
      %v587 = vld [vmem:[%s4] sm:$0xff]
      %v588 = vld [vmem:[#allocation2] sm:$0xff]
      %v589 = vld [vmem:[#allocation2 + $0x8] sm:$0xff]
      %v590 = vld [vmem:[#allocation2 + $0x10] sm:$0xff]
      %v591 = vld [vmem:[#allocation2 + $0x18] sm:$0xff]
      %v592 = vld [vmem:[#allocation2 + $0x20] sm:$0xff]
      %v593 = vld [vmem:[#allocation2 + $0x28] sm:$0xff]
      %v594 = vld [vmem:[#allocation2 + $0x30] sm:$0xff]
      %v595 = vld [vmem:[#allocation2 + $0x38] sm:$0xff]
      %v596 = vld [vmem:[#allocation2 + $0x40] sm:$0xff]
      %v597 = vld [vmem:[#allocation2 + $0x48] sm:$0xff]
      %v598 = vld [vmem:[#allocation2 + $0x50] sm:$0xff]
      %v599 = vld [vmem:[#allocation2 + $0x58] sm:$0xff]
      %v600 = vld [vmem:[#allocation2 + $0x60] sm:$0xff]
      %v601 = vld [vmem:[#allocation2 + $0x68] sm:$0xff]
      %v602 = vld [vmem:[#allocation2 + $0x70] sm:$0xff]
      %v603 = vld [vmem:[#allocation2 + $0x78] sm:$0xff]
      %v604 = vld [vmem:[#allocation2 + $0x80] sm:$0xff]
      %v605 = vld [vmem:[#allocation2 + $0x88] sm:$0xff]
      %v606 = vld [vmem:[%s5] sm:$0xff]
      %608 = vset.pattern.permute.xlu0 0
      %609 = vperm.xlu0 %608, %v606
      %v610 = vpop.permute.xlu0 %609
      %vm612 = vcmask 588800
      %v614 = vsel %vm612, %v587, 0
      %616 = vmatprep.subr.mxu0 0.0
      %617 = vmatpush1.msra.mxu0 0.0
      %618 = vmatprep.subr.mxu0 0.0
      %619 = vmatpush1.msra.mxu0 0.0
      %620 = vmatprep.subr.mxu0 0.0
      %621 = vmatpush1.msra.mxu0 0.0
      %622 = vmatprep.subr.mxu0 0.0
      %623 = vmatpush1.msra.mxu0 0.0
      %624 = vmatprep.subr.mxu0 0.0
      %625 = vmatpush1.msra.mxu0 0.0
      %626 = vmatprep.subr.mxu0 0.0
      %627 = vmatpush1.msra.mxu0 0.0
      %628 = vmatprep.subr.mxu0 0.0
      %629 = vmatpush1.msra.mxu0 0.0
      %630 = vmatprep.subr.mxu0 %v605
      %631 = vmatpush1.msra.mxu0 %v604
      %632 = vmatprep.subr.mxu0 %v603
      %633 = vmatpush1.msra.mxu0 %v602
      %634 = vmatprep.subr.mxu0 %v601
      %635 = vmatpush1.msra.mxu0 %v600
      %636 = vmatprep.subr.mxu0 %v599
      %637 = vmatpush1.msra.mxu0 %v598
      %638 = vmatprep.subr.mxu0 %v597
      %639 = vmatpush1.msra.mxu0 %v596
      %640 = vmatprep.subr.mxu0 %v595
      %641 = vmatpush1.msra.mxu0 %v594
      %642 = vmatprep.subr.mxu0 %v593
      %643 = vmatpush1.msra.mxu0 %v592
      %644 = vmatprep.subr.mxu0 %v591
      %645 = vmatpush1.msra.mxu0 %v590
      %646 = vmatprep.subr.mxu0 %v589
      %647 = vmatpush1.msra.mxu0 %v588
      %648 = vmatprep.subr.mxu0 0.0
      %649 = vmatpush2.msra.mxu0 0.0
      %650 = vmatprep.subr.mxu0 0.0
      %651 = vmatpush2.msra.mxu0 0.0
      %652 = vmatprep.subr.mxu0 0.0
      %653 = vmatpush2.msra.mxu0 0.0
      %654 = vmatprep.subr.mxu0 0.0
      %655 = vmatpush2.msra.mxu0 0.0
      %656 = vmatprep.subr.mxu0 0.0
      %657 = vmatpush2.msra.mxu0 0.0
      %658 = vmatprep.subr.mxu0 0.0
      %659 = vmatpush2.msra.mxu0 0.0
      %660 = vmatprep.subr.mxu0 0.0
      %661 = vmatpush2.msra.mxu0 0.0
      %662 = vmatprep.subr.mxu0 0.0
      %663 = vmatpush2.msra.mxu0 0.0
      %664 = vmatprep.subr.mxu0 0.0
      %665 = vmatpush2.msra.mxu0 0.0
      %666 = vmatprep.subr.mxu0 0.0
      %667 = vmatpush2.msra.mxu0 0.0
      %668 = vmatprep.subr.mxu0 0.0
      %669 = vmatpush2.msra.mxu0 0.0
      %670 = vmatprep.subr.mxu0 0.0
      %671 = vmatpush2.msra.mxu0 0.0
      %672 = vmatprep.subr.mxu0 0.0
      %673 = vmatpush2.msra.mxu0 0.0
      %674 = vmatprep.subr.mxu0 0.0
      %675 = vmatpush2.msra.mxu0 0.0
      %676 = vmatprep.subr.mxu0 0.0
      %677 = vmatpush2.msra.mxu0 0.0
      %678 = vmatprep.subr.mxu0 0.0
      %679 = vmatpush2.msra.mxu0 0.0
      %680 = vmatprep.mubr.f32.mxu0 0.0
      %681 = vmatmul.mubr.f32.gmra.mxu0 %v614
      %v682 = vpop.f32.mrf.mxu0
      %v683 = vadd.f32 %v610, %v682
      %v684 = vpop.f32.mrf.mxu0
      %v685 = vadd.f32 %v610, %v684
      %686 = vdwg.mxu0
      %vm687 = vcmp.gt.f32.partialorder %v683, 0.0
      %vm688 = vcmp.gt.f32.partialorder %v685, 0.0
      %v689 = vmul.f32 %v683, 0.2
      %v690 = vmul.f32 %v685, 0.2
      %v691 = vsel %vm687, %v683, %v689
      %v692 = vsel %vm688, %v685, %v690
      %v693 = vadd.f32 %v691, %v692
      %694 = vadd.xlane.f32.xlu0 %v693
      %v695 = vpop.xlane.xlu0 %694
      %v696 = vrcp.pop 256.0
      %v697 = vmul.f32 %v695, %v696
      %v698 = vsub.f32 %v691, %v697
      %v699 = vsub.f32 %v692, %v697
      %v700 = vmul.f32 %v698, %v698
      %v701 = vmul.f32 %v699, %v699
      %v702 = vadd.f32 %v700, %v701
      %703 = vadd.xlane.f32.xlu0 %v702
      %v704 = vpop.xlane.xlu0 %703
      %v705 = vmul.f32 %v704, %v696
      %v706 = vld [vmem:[%s6] sm:$0xff]
      %v707 = vadd.f32 %v705, 1e-08
      %v708 = vrsqrt.pop %v707
      %v709 = vmul.f32 %v706, %v708
      %711 = vset.pattern.permute.xlu0 0
      %712 = vperm.xlu0 %711, %v709
      %v713 = vpop.permute.xlu0 %712
      %v715 = vmul.f32 %v698, %v713
      %v716 = vmul.f32 %v699, %v713
      %v717 = vld [vmem:[%s7] sm:$0xff]
      %719 = vset.pattern.permute.xlu0 0
      %720 = vperm.xlu0 %719, %v717
      %v721 = vpop.permute.xlu0 %720
      %v723 = vadd.f32 %v715, %v721
      %v724 = vadd.f32 %v716, %v721
      %v725 = vadd.f32 %v388, %v723
      %v726 = vadd.f32 %v390, %v724
      %727 = vst [vmem:[%s305 + $0x10] sm:$0xff] %v725
      %728 = vst [vmem:[%s305 + $0x18] sm:$0xff] %v726
      %v729 = vadd.f32 %v723, 0.0
      %v730 = vadd.f32 %v724, 0.0
      %v731 = vadd.f32 %v388, %v729
      %v732 = vadd.f32 %v390, %v730
      %733 = vrot.lane.b32.xlu0 %v725, 17
      %v734 = vpop.permute.xlu0 %733
      %735 = vrot.lane.b32.xlu0 %v726, 17
      %v736 = vpop.permute.xlu0 %735
      %v737 = vsel %vm398, %v734, %v736
      %v738 = vsel %vm398, %v736, %v734
      %v739 = vld [vmem:[%s1] ss:$8 sm:$0x3]
      %v741 = vlaneseq
      %v742 = vshrl.u32 %v741, 7
      %v743 = vsub.s32 0, %v742
      %v744 = vrot.slane %v739, %v743
      %v745 = vlaneseq
      %v746 = vshrl.u32 %v745, 7
      %v747 = vsub.s32 1, %v746
      %v748 = vrot.slane %v739, %v747
      %v751 = vmul.f32 %v738, %v744
      %v752 = vmul.f32 %v737, %v748
      %753 = vst [vmem:[#allocation2 + $0x90] sm:$0xff] %v751
      %754 = vst [vmem:[#allocation2 + $0x98] sm:$0xff] %v752
      %755 = vrot.lane.b32.xlu0 %v725, 16
      %v756 = vpop.permute.xlu0 %755
      %757 = vrot.lane.b32.xlu0 %v726, 16
      %v758 = vpop.permute.xlu0 %757
      %v759 = vsel %vm421, %v756, %v758
      %v760 = vsel %vm421, %v758, %v756
      %v761 = vld [vmem:[%s424] ss:$8 sm:$0x3]
      %v763 = vlaneseq
      %v764 = vshrl.u32 %v763, 7
      %v765 = vsub.s32 0, %v764
      %v766 = vrot.slane %v761, %v765
      %v767 = vlaneseq
      %v768 = vshrl.u32 %v767, 7
      %v769 = vsub.s32 1, %v768
      %v770 = vrot.slane %v761, %v769
      %v773 = vmul.f32 %v760, %v766
      %v774 = vmul.f32 %v759, %v770
      %775 = vst [vmem:[#allocation2 + $0xa0] sm:$0xff] %v773
      %776 = vst [vmem:[#allocation2 + $0xa8] sm:$0xff] %v774
      %777 = vrot.lane.b32.xlu0 %v725, 15
      %v778 = vpop.permute.xlu0 %777
      %779 = vrot.lane.b32.xlu0 %v726, 15
      %v780 = vpop.permute.xlu0 %779
      %v781 = vsel %vm445, %v778, %v780
      %v782 = vsel %vm445, %v780, %v778
      %v783 = vld [vmem:[%s448] ss:$8 sm:$0x3]
      %v785 = vlaneseq
      %v786 = vshrl.u32 %v785, 7
      %v787 = vsub.s32 0, %v786
      %v788 = vrot.slane %v783, %v787
      %v789 = vlaneseq
      %v790 = vshrl.u32 %v789, 7
      %v791 = vsub.s32 1, %v790
      %v792 = vrot.slane %v783, %v791
      %v795 = vmul.f32 %v782, %v788
      %v796 = vmul.f32 %v781, %v792
      %797 = vst [vmem:[#allocation2 + $0xb0] sm:$0xff] %v795
      %798 = vst [vmem:[#allocation2 + $0xb8] sm:$0xff] %v796
      %799 = vrot.lane.b32.xlu0 %v725, 1
      %v800 = vpop.permute.xlu0 %799
      %801 = vrot.lane.b32.xlu0 %v726, 1
      %v802 = vpop.permute.xlu0 %801
      %v803 = vsel %vm469, %v800, %v802
      %v804 = vsel %vm469, %v802, %v800
      %v805 = vld [vmem:[%s472] ss:$8 sm:$0x3]
      %v807 = vlaneseq
      %v808 = vshrl.u32 %v807, 7
      %v809 = vsub.s32 0, %v808
      %v810 = vrot.slane %v805, %v809
      %v811 = vlaneseq
      %v812 = vshrl.u32 %v811, 7
      %v813 = vsub.s32 1, %v812
      %v814 = vrot.slane %v805, %v813
      %v817 = vmul.f32 %v804, %v810
      %v818 = vmul.f32 %v803, %v814
      %819 = vst [vmem:[#allocation2 + $0xc0] sm:$0xff] %v817
      %820 = vst [vmem:[#allocation2 + $0xc8] sm:$0xff] %v818
      %821 = vst [vmem:[#allocation2 + $0xd0] sm:$0xff] %v725
      %822 = vst [vmem:[#allocation2 + $0xd8] sm:$0xff] %v726
      %823 = vrot.lane.b32.xlu0 %v725, 127
      %v824 = vpop.permute.xlu0 %823
      %825 = vrot.lane.b32.xlu0 %v726, 127
      %v826 = vpop.permute.xlu0 %825
      %v827 = vsel %vm495, %v824, %v826
      %v828 = vsel %vm495, %v826, %v824
      %v829 = vld [vmem:[%s498] ss:$8 sm:$0x3]
      %v831 = vlaneseq
      %v832 = vshrl.u32 %v831, 7
      %v833 = vsub.s32 0, %v832
      %v834 = vrot.slane %v829, %v833
      %v835 = vlaneseq
      %v836 = vshrl.u32 %v835, 7
      %v837 = vsub.s32 1, %v836
      %v838 = vrot.slane %v829, %v837
      %v841 = vmul.f32 %v827, %v834
      %v842 = vmul.f32 %v828, %v838
      %843 = vst [vmem:[#allocation2 + $0xe0] sm:$0xff] %v841
      %844 = vst [vmem:[#allocation2 + $0xe8] sm:$0xff] %v842
      %845 = vrot.lane.b32.xlu0 %v725, 113
      %v846 = vpop.permute.xlu0 %845
      %847 = vrot.lane.b32.xlu0 %v726, 113
      %v848 = vpop.permute.xlu0 %847
      %v849 = vsel %vm519, %v846, %v848
      %v850 = vsel %vm519, %v848, %v846
      %v851 = vld [vmem:[%s522] ss:$8 sm:$0x3]
      %v853 = vlaneseq
      %v854 = vshrl.u32 %v853, 7
      %v855 = vsub.s32 0, %v854
      %v856 = vrot.slane %v851, %v855
      %v857 = vlaneseq
      %v858 = vshrl.u32 %v857, 7
      %v859 = vsub.s32 1, %v858
      %v860 = vrot.slane %v851, %v859
      %v863 = vmul.f32 %v849, %v856
      %v864 = vmul.f32 %v850, %v860
      %865 = vst [vmem:[#allocation2 + $0xf0] sm:$0xff] %v863
      %866 = vst [vmem:[#allocation2 + $0xf8] sm:$0xff] %v864
      %867 = vrot.lane.b32.xlu0 %v725, 112
      %v868 = vpop.permute.xlu0 %867
      %869 = vrot.lane.b32.xlu0 %v726, 112
      %v870 = vpop.permute.xlu0 %869
      %v871 = vsel %vm543, %v868, %v870
      %v872 = vsel %vm543, %v870, %v868
      %v873 = vld [vmem:[%s546] ss:$8 sm:$0x3]
      %v875 = vlaneseq
      %v876 = vshrl.u32 %v875, 7
      %v877 = vsub.s32 0, %v876
      %v878 = vrot.slane %v873, %v877
      %v879 = vlaneseq
      %v880 = vshrl.u32 %v879, 7
      %v881 = vsub.s32 1, %v880
      %v882 = vrot.slane %v873, %v881
      %v885 = vmul.f32 %v871, %v878
      %v886 = vmul.f32 %v872, %v882
      %887 = vst [vmem:[#allocation2 + $0x100] sm:$0xff] %v885
      %888 = vst [vmem:[#allocation2 + $0x108] sm:$0xff] %v886
      %889 = vrot.lane.b32.xlu0 %v725, 111
      %v890 = vpop.permute.xlu0 %889
      %891 = vrot.lane.b32.xlu0 %v726, 111
      %v892 = vpop.permute.xlu0 %891
      %v893 = vsel %vm567, %v890, %v892
      %v894 = vsel %vm567, %v892, %v890
      %v895 = vld [vmem:[%s570] ss:$8 sm:$0x3]
      %v897 = vlaneseq
      %v898 = vshrl.u32 %v897, 7
      %v899 = vsub.s32 0, %v898
      %v900 = vrot.slane %v895, %v899
      %v901 = vlaneseq
      %v902 = vshrl.u32 %v901, 7
      %v903 = vsub.s32 1, %v902
      %v904 = vrot.slane %v895, %v903
      %v907 = vmul.f32 %v893, %v900
      %v908 = vmul.f32 %v894, %v904
      %909 = vst [vmem:[#allocation2 + $0x110] sm:$0xff] %v907
      %910 = vst [vmem:[#allocation2 + $0x118] sm:$0xff] %v908
      %s911 = scalar_lea.vmem %s4, 16
      %v912 = vld [vmem:[%s911] sm:$0xff]
      %v913 = vld [vmem:[%s911 + $0x8] sm:$0xff]
      %v914 = vld [vmem:[#allocation2] sm:$0xff]
      %v915 = vld [vmem:[#allocation2 + $0x8] sm:$0xff]
      %v916 = vld [vmem:[#allocation2 + $0x10] sm:$0xff]
      %v917 = vld [vmem:[#allocation2 + $0x18] sm:$0xff]
      %v918 = vld [vmem:[#allocation2 + $0x20] sm:$0xff]
      %v919 = vld [vmem:[#allocation2 + $0x28] sm:$0xff]
      %v920 = vld [vmem:[#allocation2 + $0x30] sm:$0xff]
      %v921 = vld [vmem:[#allocation2 + $0x38] sm:$0xff]
      %v922 = vld [vmem:[#allocation2 + $0x40] sm:$0xff]
      %v923 = vld [vmem:[#allocation2 + $0x48] sm:$0xff]
      %v924 = vld [vmem:[#allocation2 + $0x50] sm:$0xff]
      %v925 = vld [vmem:[#allocation2 + $0x58] sm:$0xff]
      %v926 = vld [vmem:[#allocation2 + $0x60] sm:$0xff]
      %v927 = vld [vmem:[#allocation2 + $0x68] sm:$0xff]
      %v928 = vld [vmem:[#allocation2 + $0x70] sm:$0xff]
      %v929 = vld [vmem:[#allocation2 + $0x78] sm:$0xff]
      %v930 = vld [vmem:[#allocation2 + $0x80] sm:$0xff]
      %v931 = vld [vmem:[#allocation2 + $0x88] sm:$0xff]
      %v932 = vld [vmem:[#allocation2 + $0x90] sm:$0xff]
      %v933 = vld [vmem:[#allocation2 + $0x98] sm:$0xff]
      %v934 = vld [vmem:[#allocation2 + $0xa0] sm:$0xff]
      %v935 = vld [vmem:[#allocation2 + $0xa8] sm:$0xff]
      %v936 = vld [vmem:[#allocation2 + $0xb0] sm:$0xff]
      %v937 = vld [vmem:[#allocation2 + $0xb8] sm:$0xff]
      %v938 = vld [vmem:[#allocation2 + $0xc0] sm:$0xff]
      %v939 = vld [vmem:[#allocation2 + $0xc8] sm:$0xff]
      %v940 = vld [vmem:[#allocation2 + $0xd0] sm:$0xff]
      %v941 = vld [vmem:[#allocation2 + $0xd8] sm:$0xff]
      %v942 = vld [vmem:[#allocation2 + $0xe0] sm:$0xff]
      %v943 = vld [vmem:[#allocation2 + $0xe8] sm:$0xff]
      %v944 = vld [vmem:[#allocation2 + $0xf0] sm:$0xff]
      %v945 = vld [vmem:[#allocation2 + $0xf8] sm:$0xff]
      %v946 = vld [vmem:[#allocation2 + $0x100] sm:$0xff]
      %v947 = vld [vmem:[#allocation2 + $0x108] sm:$0xff]
      %v948 = vld [vmem:[#allocation2 + $0x110] sm:$0xff]
      %v949 = vld [vmem:[#allocation2 + $0x118] sm:$0xff]
      %s950 = scalar_lea.vmem %s5, 8
      %v951 = vld [vmem:[%s950] sm:$0xff]
      %953 = vset.pattern.permute.xlu0 0
      %954 = vperm.xlu0 %953, %v951
      %v955 = vpop.permute.xlu0 %954
      %vm957 = vcmask 130048
      %v959 = vsel %vm957, %v913, 0
      %961 = vmatprep.subr.mxu0 %v945
      %962 = vmatpush1.msra.mxu0 %v944
      %963 = vmatprep.subr.mxu0 %v943
      %964 = vmatpush1.msra.mxu0 %v942
      %965 = vmatprep.subr.mxu0 %v941
      %966 = vmatpush1.msra.mxu0 %v940
      %967 = vmatprep.subr.mxu0 %v939
      %968 = vmatpush1.msra.mxu0 %v938
      %969 = vmatprep.subr.mxu0 %v937
      %970 = vmatpush1.msra.mxu0 %v936
      %971 = vmatprep.subr.mxu0 %v935
      %972 = vmatpush1.msra.mxu0 %v934
      %973 = vmatprep.subr.mxu0 %v933
      %974 = vmatpush1.msra.mxu0 %v932
      %975 = vmatprep.subr.mxu0 %v931
      %976 = vmatpush1.msra.mxu0 %v930
      %977 = vmatprep.subr.mxu0 %v929
      %978 = vmatpush1.msra.mxu0 %v928
      %979 = vmatprep.subr.mxu0 %v927
      %980 = vmatpush1.msra.mxu0 %v926
      %981 = vmatprep.subr.mxu0 %v925
      %982 = vmatpush1.msra.mxu0 %v924
      %983 = vmatprep.subr.mxu0 %v923
      %984 = vmatpush1.msra.mxu0 %v922
      %985 = vmatprep.subr.mxu0 %v921
      %986 = vmatpush1.msra.mxu0 %v920
      %987 = vmatprep.subr.mxu0 %v919
      %988 = vmatpush1.msra.mxu0 %v918
      %989 = vmatprep.subr.mxu0 %v917
      %990 = vmatpush1.msra.mxu0 %v916
      %991 = vmatprep.subr.mxu0 %v915
      %992 = vmatpush1.msra.mxu0 %v914
      %993 = vmatprep.subr.mxu0 0.0
      %994 = vmatpush2.msra.mxu0 0.0
      %995 = vmatprep.subr.mxu0 0.0
      %996 = vmatpush2.msra.mxu0 0.0
      %997 = vmatprep.subr.mxu0 0.0
      %998 = vmatpush2.msra.mxu0 0.0
      %999 = vmatprep.subr.mxu0 0.0
      %1000 = vmatpush2.msra.mxu0 0.0
      %1001 = vmatprep.subr.mxu0 0.0
      %1002 = vmatpush2.msra.mxu0 0.0
      %1003 = vmatprep.subr.mxu0 0.0
      %1004 = vmatpush2.msra.mxu0 0.0
      %1005 = vmatprep.subr.mxu0 0.0
      %1006 = vmatpush2.msra.mxu0 0.0
      %1007 = vmatprep.subr.mxu0 0.0
      %1008 = vmatpush2.msra.mxu0 0.0
      %1009 = vmatprep.subr.mxu0 0.0
      %1010 = vmatpush2.msra.mxu0 0.0
      %1011 = vmatprep.subr.mxu0 0.0
      %1012 = vmatpush2.msra.mxu0 0.0
      %1013 = vmatprep.subr.mxu0 0.0
      %1014 = vmatpush2.msra.mxu0 0.0
      %1015 = vmatprep.subr.mxu0 0.0
      %1016 = vmatpush2.msra.mxu0 0.0
      %1017 = vmatprep.subr.mxu0 0.0
      %1018 = vmatpush2.msra.mxu0 0.0
      %1019 = vmatprep.subr.mxu0 0.0
      %1020 = vmatpush2.msra.mxu0 0.0
      %1021 = vmatprep.subr.mxu0 %v949
      %1022 = vmatpush2.msra.mxu0 %v948
      %1023 = vmatprep.subr.mxu0 %v947
      %1024 = vmatpush2.msra.mxu0 %v946
      %1025 = vmatprep.mubr.f32.mxu0 %v959
      %1026 = vmatmul.mubr.f32.gmra.mxu0 %v912
      %v1027 = vpop.f32.mrf.mxu0
      %v1028 = vadd.f32 %v955, %v1027
      %v1029 = vpop.f32.mrf.mxu0
      %v1030 = vadd.f32 %v955, %v1029
      %1031 = vdwg.mxu0
      %vm1032 = vcmp.gt.f32.partialorder %v1028, 0.0
      %vm1033 = vcmp.gt.f32.partialorder %v1030, 0.0
      %v1034 = vmul.f32 %v1028, 0.2
      %v1035 = vmul.f32 %v1030, 0.2
      %v1036 = vsel %vm1032, %v1028, %v1034
      %v1037 = vsel %vm1033, %v1030, %v1035
      %v1038 = vadd.f32 %v1036, %v1037
      %1039 = vadd.xlane.f32.xlu0 %v1038
      %v1040 = vpop.xlane.xlu0 %1039
      %v1041 = vmul.f32 %v1040, %v696
      %v1042 = vsub.f32 %v1036, %v1041
      %v1043 = vsub.f32 %v1037, %v1041
      %v1044 = vmul.f32 %v1042, %v1042
      %v1045 = vmul.f32 %v1043, %v1043
      %v1046 = vadd.f32 %v1044, %v1045
      %1047 = vadd.xlane.f32.xlu0 %v1046
      %v1048 = vpop.xlane.xlu0 %1047
      %v1049 = vmul.f32 %v1048, %v696
      %s1050 = scalar_lea.vmem %s6, 8
      %v1051 = vld [vmem:[%s1050] sm:$0xff]
      %v1052 = vadd.f32 %v1049, 1e-08
      %v1053 = vrsqrt.pop %v1052
      %v1054 = vmul.f32 %v1051, %v1053
      %1056 = vset.pattern.permute.xlu0 0
      %1057 = vperm.xlu0 %1056, %v1054
      %v1058 = vpop.permute.xlu0 %1057
      %v1060 = vmul.f32 %v1042, %v1058
      %v1061 = vmul.f32 %v1043, %v1058
      %s1062 = scalar_lea.vmem %s7, 8
      %v1063 = vld [vmem:[%s1062] sm:$0xff]
      %1065 = vset.pattern.permute.xlu0 0
      %1066 = vperm.xlu0 %1065, %v1063
      %v1067 = vpop.permute.xlu0 %1066
      %v1069 = vadd.f32 %v1060, %v1067
      %v1070 = vadd.f32 %v1061, %v1067
      %v1071 = vadd.f32 %v731, %v1069
      %v1072 = vadd.f32 %v732, %v1070
      %1073 = vst [vmem:[%s305 + $0x20] sm:$0xff] %v1071
      %1074 = vst [vmem:[%s305 + $0x28] sm:$0xff] %v1072
      %v1075 = vadd.f32 %v729, %v1069
      %v1076 = vadd.f32 %v730, %v1070
      %v1077 = vadd.f32 %v731, %v1075
      %v1078 = vadd.f32 %v732, %v1076
      %1079 = vrot.lane.b32.xlu0 %v1071, 17
      %v1080 = vpop.permute.xlu0 %1079
      %1081 = vrot.lane.b32.xlu0 %v1072, 17
      %v1082 = vpop.permute.xlu0 %1081
      %v1083 = vsel %vm398, %v1080, %v1082
      %v1084 = vsel %vm398, %v1082, %v1080
      %v1085 = vld [vmem:[%s1] ss:$8 sm:$0x3]
      %v1087 = vlaneseq
      %v1088 = vshrl.u32 %v1087, 7
      %v1089 = vsub.s32 0, %v1088
      %v1090 = vrot.slane %v1085, %v1089
      %v1091 = vlaneseq
      %v1092 = vshrl.u32 %v1091, 7
      %v1093 = vsub.s32 1, %v1092
      %v1094 = vrot.slane %v1085, %v1093
      %v1097 = vmul.f32 %v1084, %v1090
      %v1098 = vmul.f32 %v1083, %v1094
      %1099 = vst [vmem:[#allocation2 + $0x120] sm:$0xff] %v1097
      %1100 = vst [vmem:[#allocation2 + $0x128] sm:$0xff] %v1098
      %1101 = vrot.lane.b32.xlu0 %v1071, 16
      %v1102 = vpop.permute.xlu0 %1101
      %1103 = vrot.lane.b32.xlu0 %v1072, 16
      %v1104 = vpop.permute.xlu0 %1103
      %v1105 = vsel %vm421, %v1102, %v1104
      %v1106 = vsel %vm421, %v1104, %v1102
      %v1107 = vld [vmem:[%s424] ss:$8 sm:$0x3]
      %v1109 = vlaneseq
      %v1110 = vshrl.u32 %v1109, 7
      %v1111 = vsub.s32 0, %v1110
      %v1112 = vrot.slane %v1107, %v1111
      %v1113 = vlaneseq
      %v1114 = vshrl.u32 %v1113, 7
      %v1115 = vsub.s32 1, %v1114
      %v1116 = vrot.slane %v1107, %v1115
      %v1119 = vmul.f32 %v1106, %v1112
      %v1120 = vmul.f32 %v1105, %v1116
      %1121 = vst [vmem:[#allocation2 + $0x130] sm:$0xff] %v1119
      %1122 = vst [vmem:[#allocation2 + $0x138] sm:$0xff] %v1120
      %1123 = vrot.lane.b32.xlu0 %v1071, 15
      %v1124 = vpop.permute.xlu0 %1123
      %1125 = vrot.lane.b32.xlu0 %v1072, 15
      %v1126 = vpop.permute.xlu0 %1125
      %v1127 = vsel %vm445, %v1124, %v1126
      %v1128 = vsel %vm445, %v1126, %v1124
      %v1129 = vld [vmem:[%s448] ss:$8 sm:$0x3]
      %v1131 = vlaneseq
      %v1132 = vshrl.u32 %v1131, 7
      %v1133 = vsub.s32 0, %v1132
      %v1134 = vrot.slane %v1129, %v1133
      %v1135 = vlaneseq
      %v1136 = vshrl.u32 %v1135, 7
      %v1137 = vsub.s32 1, %v1136
      %v1138 = vrot.slane %v1129, %v1137
      %v1141 = vmul.f32 %v1128, %v1134
      %v1142 = vmul.f32 %v1127, %v1138
      %1143 = vst [vmem:[#allocation2 + $0x140] sm:$0xff] %v1141
      %1144 = vst [vmem:[#allocation2 + $0x148] sm:$0xff] %v1142
      %1145 = vrot.lane.b32.xlu0 %v1071, 1
      %v1146 = vpop.permute.xlu0 %1145
      %1147 = vrot.lane.b32.xlu0 %v1072, 1
      %v1148 = vpop.permute.xlu0 %1147
      %v1149 = vsel %vm469, %v1146, %v1148
      %v1150 = vsel %vm469, %v1148, %v1146
      %v1151 = vld [vmem:[%s472] ss:$8 sm:$0x3]
      %v1153 = vlaneseq
      %v1154 = vshrl.u32 %v1153, 7
      %v1155 = vsub.s32 0, %v1154
      %v1156 = vrot.slane %v1151, %v1155
      %v1157 = vlaneseq
      %v1158 = vshrl.u32 %v1157, 7
      %v1159 = vsub.s32 1, %v1158
      %v1160 = vrot.slane %v1151, %v1159
      %v1163 = vmul.f32 %v1150, %v1156
      %v1164 = vmul.f32 %v1149, %v1160
      %1165 = vst [vmem:[#allocation2 + $0x150] sm:$0xff] %v1163
      %1166 = vst [vmem:[#allocation2 + $0x158] sm:$0xff] %v1164
      %1167 = vst [vmem:[#allocation2 + $0x160] sm:$0xff] %v1071
      %1168 = vst [vmem:[#allocation2 + $0x168] sm:$0xff] %v1072
      %1169 = vrot.lane.b32.xlu0 %v1071, 127
      %v1170 = vpop.permute.xlu0 %1169
      %1171 = vrot.lane.b32.xlu0 %v1072, 127
      %v1172 = vpop.permute.xlu0 %1171
      %v1173 = vsel %vm495, %v1170, %v1172
      %v1174 = vsel %vm495, %v1172, %v1170
      %v1175 = vld [vmem:[%s498] ss:$8 sm:$0x3]
      %v1177 = vlaneseq
      %v1178 = vshrl.u32 %v1177, 7
      %v1179 = vsub.s32 0, %v1178
      %v1180 = vrot.slane %v1175, %v1179
      %v1181 = vlaneseq
      %v1182 = vshrl.u32 %v1181, 7
      %v1183 = vsub.s32 1, %v1182
      %v1184 = vrot.slane %v1175, %v1183
      %v1187 = vmul.f32 %v1173, %v1180
      %v1188 = vmul.f32 %v1174, %v1184
      %1189 = vst [vmem:[#allocation2 + $0x170] sm:$0xff] %v1187
      %1190 = vst [vmem:[#allocation2 + $0x178] sm:$0xff] %v1188
      %1191 = vrot.lane.b32.xlu0 %v1071, 113
      %v1192 = vpop.permute.xlu0 %1191
      %1193 = vrot.lane.b32.xlu0 %v1072, 113
      %v1194 = vpop.permute.xlu0 %1193
      %v1195 = vsel %vm519, %v1192, %v1194
      %v1196 = vsel %vm519, %v1194, %v1192
      %v1197 = vld [vmem:[%s522] ss:$8 sm:$0x3]
      %v1199 = vlaneseq
      %v1200 = vshrl.u32 %v1199, 7
      %v1201 = vsub.s32 0, %v1200
      %v1202 = vrot.slane %v1197, %v1201
      %v1203 = vlaneseq
      %v1204 = vshrl.u32 %v1203, 7
      %v1205 = vsub.s32 1, %v1204
      %v1206 = vrot.slane %v1197, %v1205
      %v1209 = vmul.f32 %v1195, %v1202
      %v1210 = vmul.f32 %v1196, %v1206
      %1211 = vst [vmem:[#allocation2 + $0x180] sm:$0xff] %v1209
      %1212 = vst [vmem:[#allocation2 + $0x188] sm:$0xff] %v1210
      %1213 = vrot.lane.b32.xlu0 %v1071, 112
      %v1214 = vpop.permute.xlu0 %1213
      %1215 = vrot.lane.b32.xlu0 %v1072, 112
      %v1216 = vpop.permute.xlu0 %1215
      %v1217 = vsel %vm543, %v1214, %v1216
      %v1218 = vsel %vm543, %v1216, %v1214
      %v1219 = vld [vmem:[%s546] ss:$8 sm:$0x3]
      %v1221 = vlaneseq
      %v1222 = vshrl.u32 %v1221, 7
      %v1223 = vsub.s32 0, %v1222
      %v1224 = vrot.slane %v1219, %v1223
      %v1225 = vlaneseq
      %v1226 = vshrl.u32 %v1225, 7
      %v1227 = vsub.s32 1, %v1226
      %v1228 = vrot.slane %v1219, %v1227
      %v1231 = vmul.f32 %v1217, %v1224
      %v1232 = vmul.f32 %v1218, %v1228
      %1233 = vst [vmem:[#allocation2 + $0x190] sm:$0xff] %v1231
      %1234 = vst [vmem:[#allocation2 + $0x198] sm:$0xff] %v1232
      %1235 = vrot.lane.b32.xlu0 %v1071, 111
      %v1236 = vpop.permute.xlu0 %1235
      %1237 = vrot.lane.b32.xlu0 %v1072, 111
      %v1238 = vpop.permute.xlu0 %1237
      %v1239 = vsel %vm567, %v1236, %v1238
      %v1240 = vsel %vm567, %v1238, %v1236
      %v1241 = vld [vmem:[%s570] ss:$8 sm:$0x3]
      %v1243 = vlaneseq
      %v1244 = vshrl.u32 %v1243, 7
      %v1245 = vsub.s32 0, %v1244
      %v1246 = vrot.slane %v1241, %v1245
      %v1247 = vlaneseq
      %v1248 = vshrl.u32 %v1247, 7
      %v1249 = vsub.s32 1, %v1248
      %v1250 = vrot.slane %v1241, %v1249
      %v1253 = vmul.f32 %v1239, %v1246
      %v1254 = vmul.f32 %v1240, %v1250
      %1255 = vst [vmem:[#allocation2 + $0x1a0] sm:$0xff] %v1253
      %1256 = vst [vmem:[#allocation2 + $0x1a8] sm:$0xff] %v1254
      %s1257 = scalar_lea.vmem %s4, 32
      %v1258 = vld [vmem:[%s1257] sm:$0xff]
      %v1259 = vld [vmem:[%s1257 + $0x8] sm:$0xff]
      %v1260 = vld [vmem:[#allocation2] sm:$0xff]
      %v1261 = vld [vmem:[#allocation2 + $0x8] sm:$0xff]
      %v1262 = vld [vmem:[#allocation2 + $0x10] sm:$0xff]
      %v1263 = vld [vmem:[#allocation2 + $0x18] sm:$0xff]
      %v1264 = vld [vmem:[#allocation2 + $0x20] sm:$0xff]
      %v1265 = vld [vmem:[#allocation2 + $0x28] sm:$0xff]
      %v1266 = vld [vmem:[#allocation2 + $0x30] sm:$0xff]
      %v1267 = vld [vmem:[#allocation2 + $0x38] sm:$0xff]
      %v1268 = vld [vmem:[#allocation2 + $0x40] sm:$0xff]
      %v1269 = vld [vmem:[#allocation2 + $0x48] sm:$0xff]
      %v1270 = vld [vmem:[#allocation2 + $0x50] sm:$0xff]
      %v1271 = vld [vmem:[#allocation2 + $0x58] sm:$0xff]
      %v1272 = vld [vmem:[#allocation2 + $0x60] sm:$0xff]
      %v1273 = vld [vmem:[#allocation2 + $0x68] sm:$0xff]
      %v1274 = vld [vmem:[#allocation2 + $0x70] sm:$0xff]
      %v1275 = vld [vmem:[#allocation2 + $0x78] sm:$0xff]
      %v1276 = vld [vmem:[#allocation2 + $0x80] sm:$0xff]
      %v1277 = vld [vmem:[#allocation2 + $0x88] sm:$0xff]
      %v1278 = vld [vmem:[#allocation2 + $0x90] sm:$0xff]
      %v1279 = vld [vmem:[#allocation2 + $0x98] sm:$0xff]
      %v1280 = vld [vmem:[#allocation2 + $0xa0] sm:$0xff]
      %v1281 = vld [vmem:[#allocation2 + $0xa8] sm:$0xff]
      %v1282 = vld [vmem:[#allocation2 + $0xb0] sm:$0xff]
      %v1283 = vld [vmem:[#allocation2 + $0xb8] sm:$0xff]
      %v1284 = vld [vmem:[#allocation2 + $0xc0] sm:$0xff]
      %v1285 = vld [vmem:[#allocation2 + $0xc8] sm:$0xff]
      %v1286 = vld [vmem:[#allocation2 + $0xd0] sm:$0xff]
      %v1287 = vld [vmem:[#allocation2 + $0xd8] sm:$0xff]
      %v1288 = vld [vmem:[#allocation2 + $0xe0] sm:$0xff]
      %v1289 = vld [vmem:[#allocation2 + $0xe8] sm:$0xff]
      %v1290 = vld [vmem:[#allocation2 + $0xf0] sm:$0xff]
      %v1291 = vld [vmem:[#allocation2 + $0xf8] sm:$0xff]
      %v1292 = vld [vmem:[#allocation2 + $0x100] sm:$0xff]
      %v1293 = vld [vmem:[#allocation2 + $0x108] sm:$0xff]
      %v1294 = vld [vmem:[#allocation2 + $0x110] sm:$0xff]
      %v1295 = vld [vmem:[#allocation2 + $0x118] sm:$0xff]
      %v1296 = vld [vmem:[#allocation2 + $0x120] sm:$0xff]
      %v1297 = vld [vmem:[#allocation2 + $0x128] sm:$0xff]
      %v1298 = vld [vmem:[#allocation2 + $0x130] sm:$0xff]
      %v1299 = vld [vmem:[#allocation2 + $0x138] sm:$0xff]
      %v1300 = vld [vmem:[#allocation2 + $0x140] sm:$0xff]
      %v1301 = vld [vmem:[#allocation2 + $0x148] sm:$0xff]
      %v1302 = vld [vmem:[#allocation2 + $0x150] sm:$0xff]
      %v1303 = vld [vmem:[#allocation2 + $0x158] sm:$0xff]
      %v1304 = vld [vmem:[#allocation2 + $0x160] sm:$0xff]
      %v1305 = vld [vmem:[#allocation2 + $0x168] sm:$0xff]
      %v1306 = vld [vmem:[#allocation2 + $0x170] sm:$0xff]
      %v1307 = vld [vmem:[#allocation2 + $0x178] sm:$0xff]
      %v1308 = vld [vmem:[#allocation2 + $0x180] sm:$0xff]
      %v1309 = vld [vmem:[#allocation2 + $0x188] sm:$0xff]
      %v1310 = vld [vmem:[#allocation2 + $0x190] sm:$0xff]
      %v1311 = vld [vmem:[#allocation2 + $0x198] sm:$0xff]
      %v1312 = vld [vmem:[#allocation2 + $0x1a0] sm:$0xff]
      %v1313 = vld [vmem:[#allocation2 + $0x1a8] sm:$0xff]
      %s1314 = scalar_lea.vmem %s5, 16
      %v1315 = vld [vmem:[%s1314] sm:$0xff]
      %1317 = vset.pattern.permute.xlu0 0
      %1318 = vperm.xlu0 %1317, %v1315
      %v1319 = vpop.permute.xlu0 %1318
      %vm1321 = vcmask 719872
      %v1323 = vsel %vm1321, %v1259, 0
      %1325 = vmatprep.subr.mxu0 %v1291
      %1326 = vmatpush1.msra.mxu0 %v1290
      %1327 = vmatprep.subr.mxu0 %v1289
      %1328 = vmatpush1.msra.mxu0 %v1288
      %1329 = vmatprep.subr.mxu0 %v1287
      %1330 = vmatpush1.msra.mxu0 %v1286
      %1331 = vmatprep.subr.mxu0 %v1285
      %1332 = vmatpush1.msra.mxu0 %v1284
      %1333 = vmatprep.subr.mxu0 %v1283
      %1334 = vmatpush1.msra.mxu0 %v1282
      %1335 = vmatprep.subr.mxu0 %v1281
      %1336 = vmatpush1.msra.mxu0 %v1280
      %1337 = vmatprep.subr.mxu0 %v1279
      %1338 = vmatpush1.msra.mxu0 %v1278
      %1339 = vmatprep.subr.mxu0 %v1277
      %1340 = vmatpush1.msra.mxu0 %v1276
      %1341 = vmatprep.subr.mxu0 %v1275
      %1342 = vmatpush1.msra.mxu0 %v1274
      %1343 = vmatprep.subr.mxu0 %v1273
      %1344 = vmatpush1.msra.mxu0 %v1272
      %1345 = vmatprep.subr.mxu0 %v1271
      %1346 = vmatpush1.msra.mxu0 %v1270
      %1347 = vmatprep.subr.mxu0 %v1269
      %1348 = vmatpush1.msra.mxu0 %v1268
      %1349 = vmatprep.subr.mxu0 %v1267
      %1350 = vmatpush1.msra.mxu0 %v1266
      %1351 = vmatprep.subr.mxu0 %v1265
      %1352 = vmatpush1.msra.mxu0 %v1264
      %1353 = vmatprep.subr.mxu0 %v1263
      %1354 = vmatpush1.msra.mxu0 %v1262
      %1355 = vmatprep.subr.mxu0 %v1261
      %1356 = vmatpush1.msra.mxu0 %v1260
      %1357 = vmatprep.subr.mxu0 0.0
      %1358 = vmatpush2.msra.mxu0 0.0
      %1359 = vmatprep.subr.mxu0 0.0
      %1360 = vmatpush2.msra.mxu0 0.0
      %1361 = vmatprep.subr.mxu0 0.0
      %1362 = vmatpush2.msra.mxu0 0.0
      %1363 = vmatprep.subr.mxu0 0.0
      %1364 = vmatpush2.msra.mxu0 0.0
      %1365 = vmatprep.subr.mxu0 0.0
      %1366 = vmatpush2.msra.mxu0 0.0
      %1367 = vmatprep.subr.mxu0 %v1313
      %1368 = vmatpush2.msra.mxu0 %v1312
      %1369 = vmatprep.subr.mxu0 %v1311
      %1370 = vmatpush2.msra.mxu0 %v1310
      %1371 = vmatprep.subr.mxu0 %v1309
      %1372 = vmatpush2.msra.mxu0 %v1308
      %1373 = vmatprep.subr.mxu0 %v1307
      %1374 = vmatpush2.msra.mxu0 %v1306
      %1375 = vmatprep.subr.mxu0 %v1305
      %1376 = vmatpush2.msra.mxu0 %v1304
      %1377 = vmatprep.subr.mxu0 %v1303
      %1378 = vmatpush2.msra.mxu0 %v1302
      %1379 = vmatprep.subr.mxu0 %v1301
      %1380 = vmatpush2.msra.mxu0 %v1300
      %1381 = vmatprep.subr.mxu0 %v1299
      %1382 = vmatpush2.msra.mxu0 %v1298
      %1383 = vmatprep.subr.mxu0 %v1297
      %1384 = vmatpush2.msra.mxu0 %v1296
      %1385 = vmatprep.subr.mxu0 %v1295
      %1386 = vmatpush2.msra.mxu0 %v1294
      %1387 = vmatprep.subr.mxu0 %v1293
      %1388 = vmatpush2.msra.mxu0 %v1292
      %1389 = vmatprep.mubr.f32.mxu0 %v1323
      %1390 = vmatmul.mubr.f32.gmra.mxu0 %v1258
      %v1391 = vpop.f32.mrf.mxu0
      %v1392 = vadd.f32 %v1319, %v1391
      %v1393 = vpop.f32.mrf.mxu0
      %v1394 = vadd.f32 %v1319, %v1393
      %1395 = vdwg.mxu0
      %vm1396 = vcmp.gt.f32.partialorder %v1392, 0.0
      %vm1397 = vcmp.gt.f32.partialorder %v1394, 0.0
      %v1398 = vmul.f32 %v1392, 0.2
      %v1399 = vmul.f32 %v1394, 0.2
      %v1400 = vsel %vm1396, %v1392, %v1398
      %v1401 = vsel %vm1397, %v1394, %v1399
      %v1402 = vadd.f32 %v1400, %v1401
      %1403 = vadd.xlane.f32.xlu0 %v1402
      %v1404 = vpop.xlane.xlu0 %1403
      %v1405 = vmul.f32 %v1404, %v696
      %v1406 = vsub.f32 %v1400, %v1405
      %v1407 = vsub.f32 %v1401, %v1405
      %v1408 = vmul.f32 %v1406, %v1406
      %v1409 = vmul.f32 %v1407, %v1407
      %v1410 = vadd.f32 %v1408, %v1409
      %1411 = vadd.xlane.f32.xlu0 %v1410
      %v1412 = vpop.xlane.xlu0 %1411
      %v1413 = vmul.f32 %v1412, %v696
      %s1414 = scalar_lea.vmem %s6, 16
      %v1415 = vld [vmem:[%s1414] sm:$0xff]
      %v1416 = vadd.f32 %v1413, 1e-08
      %v1417 = vrsqrt.pop %v1416
      %v1418 = vmul.f32 %v1415, %v1417
      %1420 = vset.pattern.permute.xlu0 0
      %1421 = vperm.xlu0 %1420, %v1418
      %v1422 = vpop.permute.xlu0 %1421
      %v1424 = vmul.f32 %v1406, %v1422
      %v1425 = vmul.f32 %v1407, %v1422
      %s1426 = scalar_lea.vmem %s7, 16
      %v1427 = vld [vmem:[%s1426] sm:$0xff]
      %1429 = vset.pattern.permute.xlu0 0
      %1430 = vperm.xlu0 %1429, %v1427
      %v1431 = vpop.permute.xlu0 %1430
      %v1433 = vadd.f32 %v1424, %v1431
      %v1434 = vadd.f32 %v1425, %v1431
      %v1435 = vadd.f32 %v1077, %v1433
      %v1436 = vadd.f32 %v1078, %v1434
      %1437 = vst [vmem:[%s305 + $0x30] sm:$0xff] %v1435
      %1438 = vst [vmem:[%s305 + $0x38] sm:$0xff] %v1436
      %p1439 = scmp.lt.s32.totalorder %s19, 1
      %s1440 = scalar_select %p1439, %s19, 1
      %s1441 = smul.addr %s1440, 8
      %s1442 = smul.addr %s1441, 8
      %s1443 = scalar_lea.vmem %s8, %s1442
      // Predicated region
      $region53: #{dense_block_encoder_forward.1} parent=51 // pred_check
        %p1444 = pneg %p210
      $region54: #{dense_block_encoder_forward.1} parent=51 // pred_check_branch
        %1446 = sbr.rel (%p1444) target = $region56
      $region55: #{dense_block_encoder_forward.1} parent=51 // pred_region
        _
      $region56: #{dense_block_encoder_forward.1} parent=51 // pred_fallthru
        _
    $region52: #{dense_block_encoder_forward.1} parent=5 // pred_fallthru
      _
    %p1447 = scmp.le.s32.totalorder 2, %s14
    // Predicated region
    $region57: #{dense_block_encoder_forward.1} parent=5 // pred_check
      %p1448 = pneg %p1447
    $region58: #{dense_block_encoder_forward.1} parent=5 // pred_check_branch
      %1450 = sbr.rel (%p1448) target = $region60
    $region59: #{dense_block_encoder_forward.1} parent=5 // pred_region
      %s1451 = ssub.s32 %s14, 2
      // Predicated region
      $region61: #{dense_block_encoder_forward.1} parent=59 // pred_check
        %p1452 = pneg %p216
      $region62: #{dense_block_encoder_forward.1} parent=59 // pred_check_branch
        %1454 = sbr.rel (%p1452) target = $region64
      $region63: #{dense_block_encoder_forward.1} parent=59 // pred_region
        %p1455 = scmp.lt.s32.totalorder %s20, 1
        %s1456 = scalar_select %p1455, %s20, 1
        %s1457 = smul.addr %s1456, 8
        %s1458 = smul.addr %s1457, 8
        %s1459 = scalar_lea.vmem %s8, %s1458
      $region64: #{dense_block_encoder_forward.1} parent=59 // pred_fallthru
        _
    $region60: #{dense_block_encoder_forward.1} parent=5 // pred_fallthru
      _
  $region6: #{dense_block_encoder_forward.1} parent=0 // loop_footer
    %s18 = sadd.s32 1, %s14
  $region7: #{dense_block_encoder_forward.1} parent=0 // loop_footer_branch
    %13 = sbr.rel target = $region3
  $region8: #{dense_block_encoder_forward.1} parent=0 // loop_exit
    _

</llo_original>
